<compile_context>
chip_gen: v7x
topology: tpu7x:2x2x1
jax: 0.10.0
libtpu: 0.0.40
codegen_flags: <defaults>
</compile_context>

<pallas_src>
import jax
import jax.numpy as jnp
from jax.experimental import pallas as pl
from jax.experimental.pallas import tpu as pltpu

SOM_ROWS, SOM_COLS = 3, 3
N_SOM = SOM_ROWS * SOM_COLS          # 9 real SOM nodes
N_SOM_PAD = 16                       # padded to a sublane-friendly row count
BIAS_ROWS = 16                       # 9 bias rows + 1 ||e||^2 row + padding
EMB_SQ_ROW = 9


def _round_up(n, m):
    return ((n + m - 1) // m) * m


def _default_vmem_limit_bytes():
    """Per-generation VMEM budget: physical minus headroom (v5e/v6e 128 MiB ->
    112 MiB, v7x 64 MiB -> 48 MiB). Falls back to 64 MiB if the query fails."""
    try:
        cap = int(getattr(pltpu.get_tpu_info(), "vmem_capacity_bytes"))
    except Exception:
        return 64 * 1024 * 1024
    if cap <= 0:
        return 64 * 1024 * 1024
    return max(cap - 16 * 1024 * 1024, (cap * 3) // 4)


def _make_somvae_kernel(*, B_true, BM, D_true, L_true, Dp, Hp, Lp, Somp):
    # Plain Python floats -> inlined literals (no captured jax constants).
    inv_bd = 1.0 / (B_true * D_true)
    inv_bl = 1.0 / (B_true * L_true)
    inv_b5l = 1.0 / (B_true * 5 * L_true)

    def mlp3(v, w1, b1, w2, b2, w3, b3, tanh_last):
        h = jnp.dot(v.astype(w1.dtype), w1, preferred_element_type=jnp.float32) + b1
        h = jnp.maximum(h, 0.0)
        h = jnp.dot(h.astype(w2.dtype), w2, preferred_element_type=jnp.float32) + b2
        h = jnp.maximum(h, 0.0)
        o = jnp.dot(h.astype(w3.dtype), w3, preferred_element_type=jnp.float32) + b3
        return jnp.tanh(o) if tanh_last else o

    def kernel(x_ref, emb_ref, bias_ref,
               we1, we2, we3, wq1, wq2, wq3, wd1, wd2, wd3,
               recon_ref, lpart_ref):
        x = x_ref[...]                                   # (BM, Dp) f32
        emb = emb_ref[...]                               # (Somp, Lp) f32

        # Packed biases + precomputed ||e_m||^2 (single resident DMA).
        be1 = bias_ref[0:1, 0:Hp]; be2 = bias_ref[1:2, 0:Hp]; be3 = bias_ref[2:3, 0:Lp]
        bq1 = bias_ref[3:4, 0:Hp]; bq2 = bias_ref[4:5, 0:Hp]; bq3 = bias_ref[5:6, 0:Dp]
        bd1 = bias_ref[6:7, 0:Hp]; bd2 = bias_ref[7:8, 0:Hp]; bd3 = bias_ref[8:9, 0:Dp]
        emb_sq = bias_ref[EMB_SQ_ROW:EMB_SQ_ROW + 1, 0:Somp]       # (1, Somp)

        # ---------------- encoder ----------------
        z_e = mlp3(x, we1[...], be1, we2[...], be2, we3[...], be3, True)   # (BM, Lp)

        # ---- SOM distances on the MXU: d[b,m] = |z|^2 - 2<z,e_m> + |e_m|^2 ----
        ze_sq = jnp.sum(z_e * z_e, axis=-1, keepdims=True)                 # (BM, 1)
        cross = jax.lax.dot_general(z_e, emb, (((1,), (1,)), ((), ())),
                                    preferred_element_type=jnp.float32)    # (BM, Somp)
        col = jax.lax.broadcasted_iota(jnp.int32, (BM, Somp), 1)
        dist = ze_sq + emb_sq - 2.0 * cross
        dist = jnp.where(col < N_SOM, dist, 1e30)        # mask padded SOM rows

        min_d = jnp.min(dist, axis=-1, keepdims=True)
        # first index achieving the minimum (matches torch.argmin tie-breaking)
        k = jnp.min(jnp.where(dist == min_d, col, Somp), axis=-1, keepdims=True)
        onehot_k = (col == k).astype(jnp.float32)                           # (BM, Somp)
        z_q = jnp.dot(onehot_k, emb, preferred_element_type=jnp.float32)    # (BM, Lp)

        # ---- neighbour terms: one fused selector, one cross-lane reduction ----
        # k1 = k // 3, k2 = k % 3 without integer div/mod (k in [0, 8]).
        k1 = jnp.zeros_like(k)
        for r in range(1, SOM_ROWS):
            k1 = k1 + (k >= r * SOM_COLS).astype(jnp.int32)
        k2 = k - k1 * SOM_COLS

        e_up = (k1 < SOM_ROWS - 1).astype(jnp.float32)
        e_dn = (k1 > 0).astype(jnp.float32)
        e_rt = (k2 < SOM_COLS - 1).astype(jnp.float32)
        e_lf = (k2 > 0).astype(jnp.float32)
        i_up = jnp.minimum(k1 + 1, SOM_ROWS - 1) * SOM_COLS + k2
        i_dn = jnp.maximum(k1 - 1, 0) * SOM_COLS + k2
        i_rt = k1 * SOM_COLS + jnp.minimum(k2 + 1, SOM_COLS - 1)
        i_lf = k1 * SOM_COLS + jnp.maximum(k2 - 1, 0)
        sel = ((col == i_up).astype(jnp.float32) * e_up
               + (col == i_dn).astype(jnp.float32) * e_dn
               + (col == i_rt).astype(jnp.float32) * e_rt
               + (col == i_lf).astype(jnp.float32) * e_lf)                   # (BM, Somp)
        n_exist = e_up + e_dn + e_rt + e_lf                                  # (BM, 1)
        # missing neighbour is the zero vector -> contributes |z_e - 0|^2 = ze_sq
        t_nbr = (jnp.sum(sel * dist, axis=-1, keepdims=True)
                 + (4.0 - n_exist) * ze_sq)                                  # (BM, 1)

        # ---------------- decoders ----------------
        x_q = mlp3(z_q, wq1[...], bq1, wq2[...], bq2, wq3[...], bq3, False)  # (BM, Dp)
        x_e = mlp3(z_e, wd1[...], bd1, wd2[...], bd2, wd3[...], bd3, False)  # (BM, Dp)
        recon_ref[...] = (x_q + x_e).astype(recon_ref.dtype)

        # -------- per-block loss partial (already / global denominators) --------
        row = pl.program_id(0) * BM + jax.lax.broadcasted_iota(jnp.int32, (BM, 1), 0)
        valid = row < B_true

        de = x - x_e
        dq = x - x_q
        rec_row = jnp.sum(de * de + dq * dq, axis=-1, keepdims=True)         # (BM, 1)
        commit_row = jnp.sum((z_e - z_q) ** 2, axis=-1, keepdims=True)       # (BM, 1)
        per_row = (rec_row * inv_bd
                   + commit_row * (inv_bl + inv_b5l)
                   + t_nbr * inv_b5l)                                        # (BM, 1)
        partial = jnp.sum(jnp.where(valid, per_row, 0.0), keepdims=True)     # (1, 1)
        lpart_ref[...] = jnp.broadcast_to(partial, (8, 128))

    return kernel


def somvae_forward(x, params, *, block_rows=512, weights_dtype=jnp.float32,
                   vmem_limit_bytes=None, interpret=False):
    """x: (B, d_input, d_channel) float32. Returns (loss scalar, x_q + x_e)."""
    B, S, C = x.shape
    D = S * C
    H = params["enc_w1"].shape[1]
    L = params["embeddings"].shape[-1]

    Dp, Hp, Lp = _round_up(D, 128), _round_up(H, 128), _round_up(L, 128)
    maxw = max(Dp, Hp, Lp)

    # Batch block: big enough to amortize the per-grid-step overhead, but capped
    # at ceil(B/2) so there are always >= 2 grid steps (v7x megacore).
    BM_req = _round_up(max(block_rows, 8), 8)
    BM_cap = _round_up((B + 1) // 2, 8) if B > 8 else _round_up(B, 8)
    BM = max(8, min(BM_req, BM_cap))
    Bp = _round_up(B, BM)
    nblk = Bp // BM

    f32 = jnp.float32
    x_flat = jnp.pad(x.reshape(B, D).astype(f32), ((0, Bp - B), (0, Dp - D)))

    def pw(w, rp, cp):
        w = w.astype(f32)
        return jnp.pad(w, ((0, rp - w.shape[0]), (0, cp - w.shape[1]))
                       ).astype(weights_dtype)

    we1 = pw(params["enc_w1"], Dp, Hp)
    we2 = pw(params["enc_w2"], Hp, Hp)
    we3 = pw(params["enc_w3"], Hp, Lp)
    wq1 = pw(params["decq_w1"], Lp, Hp)
    wq2 = pw(params["decq_w2"], Hp, Hp)
    wq3 = pw(params["decq_w3"], Hp, Dp)
    wd1 = pw(params["dece_w1"], Lp, Hp)
    wd2 = pw(params["dece_w2"], Hp, Hp)
    wd3 = pw(params["dece_w3"], Hp, Dp)

    emb = params["embeddings"].reshape(N_SOM, L).astype(f32)
    emb_pad = jnp.pad(emb, ((0, N_SOM_PAD - N_SOM), (0, Lp - L)))

    def pb(v):
        v = v.reshape(1, -1).astype(f32)
        return jnp.pad(v, ((0, 0), (0, maxw - v.shape[1])))

    # rows 0-8: biases; row 9: grid-invariant ||e_m||^2 hoisted out of the kernel.
    bias_rows = [pb(params[n]) for n in
                 ("enc_b1", "enc_b2", "enc_b3",
                  "decq_b1", "decq_b2", "decq_b3",
                  "dece_b1", "dece_b2", "dece_b3")]
    emb_sq = jnp.sum(emb_pad * emb_pad, axis=-1).reshape(1, N_SOM_PAD)
    bias_rows.append(pb(emb_sq))
    bias_pack = jnp.concatenate(
        bias_rows + [jnp.zeros((BIAS_ROWS - len(bias_rows), maxw), f32)], axis=0)

    kernel = _make_somvae_kernel(B_true=B, BM=BM, D_true=D, L_true=L,
                                 Dp=Dp, Hp=Hp, Lp=Lp, Somp=N_SOM_PAD)

    def resident(shape):
        # whole array, constant block index -> DMA'd once; single-buffered so it
        # occupies 1x (not 2x) VMEM.
        return pl.BlockSpec(shape, lambda i: (0, 0), pipeline_mode=pl.Buffered(1))

    in_specs = [
        pl.BlockSpec((BM, Dp), lambda i: (i, 0)),        # x: pipelined batch blocks
        resident((N_SOM_PAD, Lp)),                       # SOM embeddings
        resident((BIAS_ROWS, maxw)),                     # packed biases + ||e||^2
        resident((Dp, Hp)), resident((Hp, Hp)), resident((Hp, Lp)),   # encoder
        resident((Lp, Hp)), resident((Hp, Hp)), resident((Hp, Dp)),   # decoder_q
        resident((Lp, Hp)), resident((Hp, Hp)), resident((Hp, Dp)),   # decoder_e
    ]
    out_specs = (
        pl.BlockSpec((BM, Dp), lambda i: (i, 0)),        # recon (lane-dense Dp)
        pl.BlockSpec((8, 128), lambda i: (i, 0)),        # per-block loss partials
    )
    out_shape = (
        jax.ShapeDtypeStruct((Bp, Dp), f32),
        jax.ShapeDtypeStruct((nblk * 8, 128), f32),
    )

    if vmem_limit_bytes is None:
        vmem_limit_bytes = _default_vmem_limit_bytes()

    recon_pad, lparts = pl.pallas_call(
        kernel,
        grid=(nblk,),
        in_specs=in_specs,
        out_specs=out_specs,
        out_shape=out_shape,
        compiler_params=pltpu.CompilerParams(
            dimension_semantics=("parallel",),
            vmem_limit_bytes=int(vmem_limit_bytes)),
        interpret=interpret,
    )(x_flat, emb_pad, bias_pack, we1, we2, we3, wq1, wq2, wq3, wd1, wd2, wd3)

    loss = jnp.sum(lparts[::8, 0])
    recon = recon_pad[:B, :D].reshape(B, S, C)
    return loss, recon


def somvae_reference(x, params, weights_dtype=jnp.float32):
    """Pure-JAX reference mirroring the PyTorch forward (y=None path).
    `weights_dtype` mirrors the kernel's optional bf16 weight/activation cast so
    both paths can be compared at matching matmul precision."""
    B, S, C = x.shape
    L = params["embeddings"].shape[-1]
    xf = x.reshape(B, -1).astype(jnp.float32)

    def mm(v, w):
        return jnp.dot(v.astype(weights_dtype), w.astype(weights_dtype),
                       preferred_element_type=jnp.float32)

    def mlp3(v, w1, b1, w2, b2, w3, b3, tanh_last=False):
        h = jax.nn.relu(mm(v, w1) + b1.reshape(1, -1))
        h = jax.nn.relu(mm(h, w2) + b2.reshape(1, -1))
        o = mm(h, w3) + b3.reshape(1, -1)
        return jnp.tanh(o) if tanh_last else o

    z_e = mlp3(xf, params["enc_w1"], params["enc_b1"], params["enc_w2"],
               params["enc_b2"], params["enc_w3"], params["enc_b3"], True)
    emb = params["embeddings"].reshape(N_SOM, L).astype(jnp.float32)
    dist = jnp.sum((z_e[:, None, :] - emb[None, :, :]) ** 2, axis=-1)
    k = jnp.argmin(dist, axis=-1)
    z_q = emb[k]
    k1, k2 = k // SOM_COLS, k % SOM_COLS

    def nbr(mask, idx):
        return mask[:, None].astype(jnp.float32) * emb[idx]

    z_up = nbr(k1 < SOM_ROWS - 1, jnp.minimum(k1 + 1, SOM_ROWS - 1) * SOM_COLS + k2)
    z_dn = nbr(k1 > 0, jnp.maximum(k1 - 1, 0) * SOM_COLS + k2)
    z_rt = nbr(k2 < SOM_COLS - 1, k1 * SOM_COLS + jnp.minimum(k2 + 1, SOM_COLS - 1))
    z_lf = nbr(k2 > 0, k1 * SOM_COLS + jnp.maximum(k2 - 1, 0))
    z_nb = jnp.stack([z_q, z_up, z_dn, z_rt, z_lf], axis=1)

    x_q = mlp3(z_q, params["decq_w1"], params["decq_b1"], params["decq_w2"],
               params["decq_b2"], params["decq_w3"], params["decq_b3"])
    x_e = mlp3(z_e, params["dece_w1"], params["dece_b1"], params["dece_w2"],
               params["dece_b2"], params["dece_w3"], params["dece_b3"])

    loss = (jnp.mean((xf - x_e) ** 2) + jnp.mean((xf - x_q) ** 2)
            + jnp.mean((z_e - z_q) ** 2)
            + jnp.mean((z_e[:, None, :] - z_nb) ** 2))
    return loss, (x_q + x_e).reshape(B, S, C)


def init_params(key, d_input, d_channel, d_enc_dec, d_latent):
    D = d_input * d_channel
    H = d_enc_dec
    L = d_latent
    ks = jax.random.split(key, 16)

    def lin(k, fan_in, fan_out):
        w = jax.random.normal(k, (fan_in, fan_out), jnp.float32) * 0.1
        b = jnp.zeros((1, fan_out), jnp.float32)
        return w, b

    p = {}
    p["enc_w1"], p["enc_b1"] = lin(ks[0], D, H)
    p["enc_w2"], p["enc_b2"] = lin(ks[1], H, H)
    p["enc_w3"], p["enc_b3"] = lin(ks[2], H, L)
    p["decq_w1"], p["decq_b1"] = lin(ks[3], L, H)
    p["decq_w2"], p["decq_b2"] = lin(ks[4], H, H)
    p["decq_w3"], p["decq_b3"] = lin(ks[5], H, D)
    p["dece_w1"], p["dece_b1"] = lin(ks[6], L, H)
    p["dece_w2"], p["dece_b2"] = lin(ks[7], H, H)
    p["dece_w3"], p["dece_b3"] = lin(ks[8], H, D)
    # trunc_normal(std=0.05, a=-0.1, b=0.1)-style noise plus a deterministic
    # spread so the nearest-node decision in the test is numerically unambiguous
    # across matmul-precision differences between the kernel and the reference.
    base = jnp.clip(jax.random.normal(ks[9], (N_SOM, L), jnp.float32) * 0.05,
                    -0.1, 0.1)
    spread = 0.4 * jnp.eye(N_SOM, L, dtype=jnp.float32)
    p["embeddings"] = (base + spread).reshape(SOM_ROWS, SOM_COLS, L)
    return p


if __name__ == "__main__":
    # Small shapes consistent with the module: x is (B, d_input, d_channel)
    B, d_input, d_channel = 2, 16, 4
    d_enc_dec, d_latent = 32, 8

    key = jax.random.PRNGKey(0)
    kx, kx2, kp = jax.random.split(key, 3)
    x = jax.random.normal(kx, (B, d_input, d_channel), jnp.float32)
    params = init_params(kp, d_input, d_channel, d_enc_dec, d_latent)

    # f32 path, single batch block
    loss, recon = somvae_forward(x, params)
    jax.block_until_ready((loss, recon))
    loss_ref, recon_ref = somvae_reference(x, params)
    assert jnp.allclose(loss, loss_ref, rtol=2e-2, atol=2e-3), (loss, loss_ref)
    assert jnp.allclose(recon, recon_ref, rtol=2e-2, atol=2e-3)

    # multi-block grid path (20 rows -> 3 blocks of 8, padded tail masked)
    x2 = jax.random.normal(kx2, (20, d_input, d_channel), jnp.float32)
    loss2, recon2 = somvae_forward(x2, params, block_rows=8)
    jax.block_until_ready((loss2, recon2))
    loss2_ref, recon2_ref = somvae_reference(x2, params)
    assert jnp.allclose(loss2, loss2_ref, rtol=2e-2, atol=2e-3), (loss2, loss2_ref)
    assert jnp.allclose(recon2, recon2_ref, rtol=2e-2, atol=2e-3)

    # default block sizing (>= 2 blocks for megacore) on the same 20-row batch
    loss3, recon3 = somvae_forward(x2, params)
    jax.block_until_ready((loss3, recon3))
    assert jnp.allclose(loss3, loss2_ref, rtol=2e-2, atol=2e-3), (loss3, loss2_ref)
    assert jnp.allclose(recon3, recon2_ref, rtol=2e-2, atol=2e-3)

    # bf16-resident-weight path (v6e/v7x): checked against a matching bf16 reference
    loss_bf, recon_bf = somvae_forward(x, params, weights_dtype=jnp.bfloat16)
    jax.block_until_ready((loss_bf, recon_bf))
    loss_bf_ref, recon_bf_ref = somvae_reference(x, params,
                                                 weights_dtype=jnp.bfloat16)
    assert jnp.allclose(loss_bf, loss_bf_ref, rtol=5e-2, atol=5e-3), (loss_bf, loss_bf_ref)
    assert jnp.allclose(recon_bf, recon_bf_ref, rtol=5e-2, atol=5e-3)

    print("KERNEL_OK")
</pallas_src>

<mosaic_0001>
module attributes {stable_mosaic.version = 11 : i64} {
  func.func @kernel(%arg0: i32, %arg1: memref<8x128xf32, #tpu.memory_space<vmem>>, %arg2: memref<16x128xf32, #tpu.memory_space<vmem>>, %arg3: memref<16x128xf32, #tpu.memory_space<vmem>>, %arg4: memref<128x128xf32, #tpu.memory_space<vmem>>, %arg5: memref<128x128xf32, #tpu.memory_space<vmem>>, %arg6: memref<128x128xf32, #tpu.memory_space<vmem>>, %arg7: memref<128x128xf32, #tpu.memory_space<vmem>>, %arg8: memref<128x128xf32, #tpu.memory_space<vmem>>, %arg9: memref<128x128xf32, #tpu.memory_space<vmem>>, %arg10: memref<128x128xf32, #tpu.memory_space<vmem>>, %arg11: memref<128x128xf32, #tpu.memory_space<vmem>>, %arg12: memref<128x128xf32, #tpu.memory_space<vmem>>, %arg13: memref<8x128xf32, #tpu.memory_space<vmem>>, %arg14: memref<8x128xf32, #tpu.memory_space<vmem>>) attributes {dimension_semantics = [#tpu.dimension_semantics<parallel>], iteration_bounds = array<i64: 1>, scalar_prefetch = 0 : i64, scratch_operands = 0 : i64, tpu.core_type = #tpu.core_type<tc>, window_params = [{transform_indices = @transform_0, window_bounds = array<i64: 8, 128>}, {pipeline_mode = #tpu.pipeline_mode<synchronous>, transform_indices = @transform_1, window_bounds = array<i64: 16, 128>}, {pipeline_mode = #tpu.pipeline_mode<synchronous>, transform_indices = @transform_2, window_bounds = array<i64: 16, 128>}, {pipeline_mode = #tpu.pipeline_mode<synchronous>, transform_indices = @transform_3, window_bounds = array<i64: 128, 128>}, {pipeline_mode = #tpu.pipeline_mode<synchronous>, transform_indices = @transform_4, window_bounds = array<i64: 128, 128>}, {pipeline_mode = #tpu.pipeline_mode<synchronous>, transform_indices = @transform_5, window_bounds = array<i64: 128, 128>}, {pipeline_mode = #tpu.pipeline_mode<synchronous>, transform_indices = @transform_6, window_bounds = array<i64: 128, 128>}, {pipeline_mode = #tpu.pipeline_mode<synchronous>, transform_indices = @transform_7, window_bounds = array<i64: 128, 128>}, {pipeline_mode = #tpu.pipeline_mode<synchronous>, transform_indices = @transform_8, window_bounds = array<i64: 128, 128>}, {pipeline_mode = #tpu.pipeline_mode<synchronous>, transform_indices = @transform_9, window_bounds = array<i64: 128, 128>}, {pipeline_mode = #tpu.pipeline_mode<synchronous>, transform_indices = @transform_10, window_bounds = array<i64: 128, 128>}, {pipeline_mode = #tpu.pipeline_mode<synchronous>, transform_indices = @transform_11, window_bounds = array<i64: 128, 128>}, {transform_indices = @transform_12, window_bounds = array<i64: 8, 128>}, {transform_indices = @transform_13, window_bounds = array<i64: 8, 128>}]} {
    %c0 = arith.constant 0 : index
    %c0_0 = arith.constant 0 : index
    %0 = vector.load %arg1[%c0, %c0_0] : memref<8x128xf32, #tpu.memory_space<vmem>>, vector<8x128xf32>
    %c0_1 = arith.constant 0 : index
    %c0_2 = arith.constant 0 : index
    %1 = vector.load %arg2[%c0_1, %c0_2] : memref<16x128xf32, #tpu.memory_space<vmem>>, vector<16x128xf32>
    %c0_3 = arith.constant 0 : index
    %c0_4 = arith.constant 0 : index
    %2 = vector.load %arg3[%c0_3, %c0_4] : memref<16x128xf32, #tpu.memory_space<vmem>>, vector<1x128xf32>
    %c1 = arith.constant 1 : index
    %c0_5 = arith.constant 0 : index
    %3 = vector.load %arg3[%c1, %c0_5] : memref<16x128xf32, #tpu.memory_space<vmem>>, vector<1x128xf32>
    %c2 = arith.constant 2 : index
    %c0_6 = arith.constant 0 : index
    %4 = vector.load %arg3[%c2, %c0_6] : memref<16x128xf32, #tpu.memory_space<vmem>>, vector<1x128xf32>
    %c3 = arith.constant 3 : index
    %c0_7 = arith.constant 0 : index
    %5 = vector.load %arg3[%c3, %c0_7] : memref<16x128xf32, #tpu.memory_space<vmem>>, vector<1x128xf32>
    %c4 = arith.constant 4 : index
    %c0_8 = arith.constant 0 : index
    %6 = vector.load %arg3[%c4, %c0_8] : memref<16x128xf32, #tpu.memory_space<vmem>>, vector<1x128xf32>
    %c5 = arith.constant 5 : index
    %c0_9 = arith.constant 0 : index
    %7 = vector.load %arg3[%c5, %c0_9] : memref<16x128xf32, #tpu.memory_space<vmem>>, vector<1x128xf32>
    %c6 = arith.constant 6 : index
    %c0_10 = arith.constant 0 : index
    %8 = vector.load %arg3[%c6, %c0_10] : memref<16x128xf32, #tpu.memory_space<vmem>>, vector<1x128xf32>
    %c7 = arith.constant 7 : index
    %c0_11 = arith.constant 0 : index
    %9 = vector.load %arg3[%c7, %c0_11] : memref<16x128xf32, #tpu.memory_space<vmem>>, vector<1x128xf32>
    %c8 = arith.constant 8 : index
    %c0_12 = arith.constant 0 : index
    %10 = vector.load %arg3[%c8, %c0_12] : memref<16x128xf32, #tpu.memory_space<vmem>>, vector<1x128xf32>
    %c9 = arith.constant 9 : index
    %c0_13 = arith.constant 0 : index
    %11 = vector.load %arg3[%c9, %c0_13] : memref<16x128xf32, #tpu.memory_space<vmem>>, vector<1x16xf32>
    %c0_14 = arith.constant 0 : index
    %c0_15 = arith.constant 0 : index
    %12 = vector.load %arg4[%c0_14, %c0_15] : memref<128x128xf32, #tpu.memory_space<vmem>>, vector<128x128xf32>
    %c0_16 = arith.constant 0 : index
    %c0_17 = arith.constant 0 : index
    %13 = vector.load %arg5[%c0_16, %c0_17] : memref<128x128xf32, #tpu.memory_space<vmem>>, vector<128x128xf32>
    %c0_18 = arith.constant 0 : index
    %c0_19 = arith.constant 0 : index
    %14 = vector.load %arg6[%c0_18, %c0_19] : memref<128x128xf32, #tpu.memory_space<vmem>>, vector<128x128xf32>
    %cst = arith.constant dense<0.000000e+00> : vector<8x128xf32>
    %15 = tpu.matmul %0, %12, %cst {dimension_numbers = #tpu.dot_dimension_numbers<[1], [0], [0], [1], [0, 0, 1, 1], [], []>} : vector<8x128xf32>, vector<128x128xf32>, vector<8x128xf32> -> vector<8x128xf32>
    %16 = vector.broadcast %2 : vector<1x128xf32> to vector<8x128xf32>
    %17 = arith.addf %15, %16 : vector<8x128xf32>
    %cst_20 = arith.constant 0.000000e+00 : f32
    %18 = vector.broadcast %cst_20 : f32 to vector<8x128xf32>
    %19 = arith.maximumf %17, %18 : vector<8x128xf32>
    %cst_21 = arith.constant dense<0.000000e+00> : vector<8x128xf32>
    %20 = tpu.matmul %19, %13, %cst_21 {dimension_numbers = #tpu.dot_dimension_numbers<[1], [0], [0], [1], [0, 0, 1, 1], [], []>} : vector<8x128xf32>, vector<128x128xf32>, vector<8x128xf32> -> vector<8x128xf32>
    %21 = vector.broadcast %3 : vector<1x128xf32> to vector<8x128xf32>
    %22 = arith.addf %20, %21 : vector<8x128xf32>
    %cst_22 = arith.constant 0.000000e+00 : f32
    %23 = vector.broadcast %cst_22 : f32 to vector<8x128xf32>
    %24 = arith.maximumf %22, %23 : vector<8x128xf32>
    %cst_23 = arith.constant dense<0.000000e+00> : vector<8x128xf32>
    %25 = tpu.matmul %24, %14, %cst_23 {dimension_numbers = #tpu.dot_dimension_numbers<[1], [0], [0], [1], [0, 0, 1, 1], [], []>} : vector<8x128xf32>, vector<128x128xf32>, vector<8x128xf32> -> vector<8x128xf32>
    %26 = vector.broadcast %4 : vector<1x128xf32> to vector<8x128xf32>
    %27 = arith.addf %25, %26 : vector<8x128xf32>
    %28 = math.tanh %27 : vector<8x128xf32>
    %29 = arith.mulf %28, %28 : vector<8x128xf32>
    %cst_24 = arith.constant dense<0.000000e+00> : vector<8xf32>
    %30 = vector.multi_reduction <add>, %29, %cst_24 [1] : vector<8x128xf32> to vector<8xf32>
    %31 = vector.shape_cast %30 : vector<8xf32> to vector<8x1xf32>
    %cst_25 = arith.constant dense<0.000000e+00> : vector<8x16xf32>
    %32 = tpu.matmul %28, %1, %cst_25 {dimension_numbers = #tpu.dot_dimension_numbers<[1], [1], [0], [0], [0, 0, 1, 0], [], []>} : vector<8x128xf32>, vector<16x128xf32>, vector<8x16xf32> -> vector<8x16xf32>
    %33 = tpu.iota {dimensions = array<i32: 1>} : vector<8x16xi32>
    %34 = vector.broadcast %31 : vector<8x1xf32> to vector<8x16xf32>
    %35 = vector.broadcast %11 : vector<1x16xf32> to vector<8x16xf32>
    %36 = arith.addf %34, %35 : vector<8x16xf32>
    %cst_26 = arith.constant 2.000000e+00 : f32
    %37 = vector.broadcast %cst_26 : f32 to vector<8x16xf32>
    %38 = arith.mulf %37, %32 : vector<8x16xf32>
    %39 = arith.subf %36, %38 : vector<8x16xf32>
    %c9_i32 = arith.constant 9 : i32
    %40 = vector.broadcast %c9_i32 : i32 to vector<8x16xi32>
    %41 = arith.cmpi slt, %33, %40 : vector<8x16xi32>
    %cst_27 = arith.constant 1.000000e+30 : f32
    %42 = vector.broadcast %cst_27 : f32 to vector<8x16xf32>
    %43 = arith.select %41, %39, %42 : vector<8x16xi1>, vector<8x16xf32>
    %cst_28 = arith.constant dense<0x7F800000> : vector<8xf32>
    %44 = vector.multi_reduction <minimumf>, %43, %cst_28 [1] : vector<8x16xf32> to vector<8xf32>
    %45 = vector.shape_cast %44 : vector<8xf32> to vector<8x1xf32>
    %46 = vector.broadcast %45 : vector<8x1xf32> to vector<8x16xf32>
    %47 = arith.cmpf oeq, %43, %46 : vector<8x16xf32>
    %c16_i32 = arith.constant 16 : i32
    %48 = vector.broadcast %c16_i32 : i32 to vector<8x16xi32>
    %49 = arith.select %47, %33, %48 : vector<8x16xi1>, vector<8x16xi32>
    %cst_29 = arith.constant dense<2147483647> : vector<8xi32>
    %50 = vector.multi_reduction <minsi>, %49, %cst_29 [1] : vector<8x16xi32> to vector<8xi32>
    %51 = vector.shape_cast %50 : vector<8xi32> to vector<8x1xi32>
    %52 = vector.broadcast %51 : vector<8x1xi32> to vector<8x16xi32>
    %53 = arith.cmpi eq, %33, %52 : vector<8x16xi32>
    %54 = arith.extui %53 : vector<8x16xi1> to vector<8x16xi32>
    %55 = arith.sitofp %54 : vector<8x16xi32> to vector<8x16xf32>
    %cst_30 = arith.constant dense<0.000000e+00> : vector<8x128xf32>
    %56 = tpu.matmul %55, %1, %cst_30 {dimension_numbers = #tpu.dot_dimension_numbers<[1], [0], [0], [1], [0, 0, 1, 1], [], []>} : vector<8x16xf32>, vector<16x128xf32>, vector<8x128xf32> -> vector<8x128xf32>
    %c0_i32 = arith.constant 0 : i32
    %57 = vector.broadcast %c0_i32 : i32 to vector<8x1xi32>
    %c3_i32 = arith.constant 3 : i32
    %58 = vector.broadcast %c3_i32 : i32 to vector<8x1xi32>
    %59 = arith.cmpi sge, %51, %58 : vector<8x1xi32>
    %60 = arith.extui %59 : vector<8x1xi1> to vector<8x1xi32>
    %61 = arith.addi %57, %60 : vector<8x1xi32>
    %c6_i32 = arith.constant 6 : i32
    %62 = vector.broadcast %c6_i32 : i32 to vector<8x1xi32>
    %63 = arith.cmpi sge, %51, %62 : vector<8x1xi32>
    %64 = arith.extui %63 : vector<8x1xi1> to vector<8x1xi32>
    %65 = arith.addi %61, %64 : vector<8x1xi32>
    %c3_i32_31 = arith.constant 3 : i32
    %66 = vector.broadcast %c3_i32_31 : i32 to vector<8x1xi32>
    %67 = arith.muli %65, %66 : vector<8x1xi32>
    %68 = arith.subi %51, %67 : vector<8x1xi32>
    %c2_i32 = arith.constant 2 : i32
    %69 = vector.broadcast %c2_i32 : i32 to vector<8x1xi32>
    %70 = arith.cmpi slt, %65, %69 : vector<8x1xi32>
    %71 = arith.extui %70 : vector<8x1xi1> to vector<8x1xi32>
    %72 = arith.sitofp %71 : vector<8x1xi32> to vector<8x1xf32>
    %c0_i32_32 = arith.constant 0 : i32
    %73 = vector.broadcast %c0_i32_32 : i32 to vector<8x1xi32>
    %74 = arith.cmpi sgt, %65, %73 : vector<8x1xi32>
    %75 = arith.extui %74 : vector<8x1xi1> to vector<8x1xi32>
    %76 = arith.sitofp %75 : vector<8x1xi32> to vector<8x1xf32>
    %c2_i32_33 = arith.constant 2 : i32
    %77 = vector.broadcast %c2_i32_33 : i32 to vector<8x1xi32>
    %78 = arith.cmpi slt, %68, %77 : vector<8x1xi32>
    %79 = arith.extui %78 : vector<8x1xi1> to vector<8x1xi32>
    %80 = arith.sitofp %79 : vector<8x1xi32> to vector<8x1xf32>
    %c0_i32_34 = arith.constant 0 : i32
    %81 = vector.broadcast %c0_i32_34 : i32 to vector<8x1xi32>
    %82 = arith.cmpi sgt, %68, %81 : vector<8x1xi32>
    %83 = arith.extui %82 : vector<8x1xi1> to vector<8x1xi32>
    %84 = arith.sitofp %83 : vector<8x1xi32> to vector<8x1xf32>
    %c1_i32 = arith.constant 1 : i32
    %85 = vector.broadcast %c1_i32 : i32 to vector<8x1xi32>
    %86 = arith.addi %65, %85 : vector<8x1xi32>
    %c2_i32_35 = arith.constant 2 : i32
    %87 = vector.broadcast %c2_i32_35 : i32 to vector<8x1xi32>
    %88 = arith.minsi %86, %87 : vector<8x1xi32>
    %c3_i32_36 = arith.constant 3 : i32
    %89 = vector.broadcast %c3_i32_36 : i32 to vector<8x1xi32>
    %90 = arith.muli %88, %89 : vector<8x1xi32>
    %91 = arith.addi %90, %68 : vector<8x1xi32>
    %c1_i32_37 = arith.constant 1 : i32
    %92 = vector.broadcast %c1_i32_37 : i32 to vector<8x1xi32>
    %93 = arith.subi %65, %92 : vector<8x1xi32>
    %c0_i32_38 = arith.constant 0 : i32
    %94 = vector.broadcast %c0_i32_38 : i32 to vector<8x1xi32>
    %95 = arith.maxsi %93, %94 : vector<8x1xi32>
    %c3_i32_39 = arith.constant 3 : i32
    %96 = vector.broadcast %c3_i32_39 : i32 to vector<8x1xi32>
    %97 = arith.muli %95, %96 : vector<8x1xi32>
    %98 = arith.addi %97, %68 : vector<8x1xi32>
    %c3_i32_40 = arith.constant 3 : i32
    %99 = vector.broadcast %c3_i32_40 : i32 to vector<8x1xi32>
    %100 = arith.muli %65, %99 : vector<8x1xi32>
    %c1_i32_41 = arith.constant 1 : i32
    %101 = vector.broadcast %c1_i32_41 : i32 to vector<8x1xi32>
    %102 = arith.addi %68, %101 : vector<8x1xi32>
    %c2_i32_42 = arith.constant 2 : i32
    %103 = vector.broadcast %c2_i32_42 : i32 to vector<8x1xi32>
    %104 = arith.minsi %102, %103 : vector<8x1xi32>
    %105 = arith.addi %100, %104 : vector<8x1xi32>
    %c3_i32_43 = arith.constant 3 : i32
    %106 = vector.broadcast %c3_i32_43 : i32 to vector<8x1xi32>
    %107 = arith.muli %65, %106 : vector<8x1xi32>
    %c1_i32_44 = arith.constant 1 : i32
    %108 = vector.broadcast %c1_i32_44 : i32 to vector<8x1xi32>
    %109 = arith.subi %68, %108 : vector<8x1xi32>
    %c0_i32_45 = arith.constant 0 : i32
    %110 = vector.broadcast %c0_i32_45 : i32 to vector<8x1xi32>
    %111 = arith.maxsi %109, %110 : vector<8x1xi32>
    %112 = arith.addi %107, %111 : vector<8x1xi32>
    %113 = vector.broadcast %91 : vector<8x1xi32> to vector<8x16xi32>
    %114 = arith.cmpi eq, %33, %113 : vector<8x16xi32>
    %115 = arith.extui %114 : vector<8x16xi1> to vector<8x16xi32>
    %116 = arith.sitofp %115 : vector<8x16xi32> to vector<8x16xf32>
    %117 = vector.broadcast %72 : vector<8x1xf32> to vector<8x16xf32>
    %118 = arith.mulf %116, %117 : vector<8x16xf32>
    %119 = vector.broadcast %98 : vector<8x1xi32> to vector<8x16xi32>
    %120 = arith.cmpi eq, %33, %119 : vector<8x16xi32>
    %121 = arith.extui %120 : vector<8x16xi1> to vector<8x16xi32>
    %122 = arith.sitofp %121 : vector<8x16xi32> to vector<8x16xf32>
    %123 = vector.broadcast %76 : vector<8x1xf32> to vector<8x16xf32>
    %124 = arith.mulf %122, %123 : vector<8x16xf32>
    %125 = arith.addf %118, %124 : vector<8x16xf32>
    %126 = vector.broadcast %105 : vector<8x1xi32> to vector<8x16xi32>
    %127 = arith.cmpi eq, %33, %126 : vector<8x16xi32>
    %128 = arith.extui %127 : vector<8x16xi1> to vector<8x16xi32>
    %129 = arith.sitofp %128 : vector<8x16xi32> to vector<8x16xf32>
    %130 = vector.broadcast %80 : vector<8x1xf32> to vector<8x16xf32>
    %131 = arith.mulf %129, %130 : vector<8x16xf32>
    %132 = arith.addf %125, %131 : vector<8x16xf32>
    %133 = vector.broadcast %112 : vector<8x1xi32> to vector<8x16xi32>
    %134 = arith.cmpi eq, %33, %133 : vector<8x16xi32>
    %135 = arith.extui %134 : vector<8x16xi1> to vector<8x16xi32>
    %136 = arith.sitofp %135 : vector<8x16xi32> to vector<8x16xf32>
    %137 = vector.broadcast %84 : vector<8x1xf32> to vector<8x16xf32>
    %138 = arith.mulf %136, %137 : vector<8x16xf32>
    %139 = arith.addf %132, %138 : vector<8x16xf32>
    %140 = arith.addf %72, %76 : vector<8x1xf32>
    %141 = arith.addf %140, %80 : vector<8x1xf32>
    %142 = arith.addf %141, %84 : vector<8x1xf32>
    %143 = arith.mulf %139, %43 : vector<8x16xf32>
    %cst_46 = arith.constant dense<0.000000e+00> : vector<8xf32>
    %144 = vector.multi_reduction <add>, %143, %cst_46 [1] : vector<8x16xf32> to vector<8xf32>
    %145 = vector.shape_cast %144 : vector<8xf32> to vector<8x1xf32>
    %cst_47 = arith.constant 4.000000e+00 : f32
    %146 = vector.broadcast %cst_47 : f32 to vector<8x1xf32>
    %147 = arith.subf %146, %142 : vector<8x1xf32>
    %148 = arith.mulf %147, %31 : vector<8x1xf32>
    %149 = arith.addf %145, %148 : vector<8x1xf32>
    %c0_48 = arith.constant 0 : index
    %c0_49 = arith.constant 0 : index
    %150 = vector.load %arg7[%c0_48, %c0_49] : memref<128x128xf32, #tpu.memory_space<vmem>>, vector<128x128xf32>
    %c0_50 = arith.constant 0 : index
    %c0_51 = arith.constant 0 : index
    %151 = vector.load %arg8[%c0_50, %c0_51] : memref<128x128xf32, #tpu.memory_space<vmem>>, vector<128x128xf32>
    %c0_52 = arith.constant 0 : index
    %c0_53 = arith.constant 0 : index
    %152 = vector.load %arg9[%c0_52, %c0_53] : memref<128x128xf32, #tpu.memory_space<vmem>>, vector<128x128xf32>
    %cst_54 = arith.constant dense<0.000000e+00> : vector<8x128xf32>
    %153 = tpu.matmul %56, %150, %cst_54 {dimension_numbers = #tpu.dot_dimension_numbers<[1], [0], [0], [1], [0, 0, 1, 1], [], []>} : vector<8x128xf32>, vector<128x128xf32>, vector<8x128xf32> -> vector<8x128xf32>
    %154 = vector.broadcast %5 : vector<1x128xf32> to vector<8x128xf32>
    %155 = arith.addf %153, %154 : vector<8x128xf32>
    %cst_55 = arith.constant 0.000000e+00 : f32
    %156 = vector.broadcast %cst_55 : f32 to vector<8x128xf32>
    %157 = arith.maximumf %155, %156 : vector<8x128xf32>
    %cst_56 = arith.constant dense<0.000000e+00> : vector<8x128xf32>
    %158 = tpu.matmul %157, %151, %cst_56 {dimension_numbers = #tpu.dot_dimension_numbers<[1], [0], [0], [1], [0, 0, 1, 1], [], []>} : vector<8x128xf32>, vector<128x128xf32>, vector<8x128xf32> -> vector<8x128xf32>
    %159 = vector.broadcast %6 : vector<1x128xf32> to vector<8x128xf32>
    %160 = arith.addf %158, %159 : vector<8x128xf32>
    %cst_57 = arith.constant 0.000000e+00 : f32
    %161 = vector.broadcast %cst_57 : f32 to vector<8x128xf32>
    %162 = arith.maximumf %160, %161 : vector<8x128xf32>
    %cst_58 = arith.constant dense<0.000000e+00> : vector<8x128xf32>
    %163 = tpu.matmul %162, %152, %cst_58 {dimension_numbers = #tpu.dot_dimension_numbers<[1], [0], [0], [1], [0, 0, 1, 1], [], []>} : vector<8x128xf32>, vector<128x128xf32>, vector<8x128xf32> -> vector<8x128xf32>
    %164 = vector.broadcast %7 : vector<1x128xf32> to vector<8x128xf32>
    %165 = arith.addf %163, %164 : vector<8x128xf32>
    %c0_59 = arith.constant 0 : index
    %c0_60 = arith.constant 0 : index
    %166 = vector.load %arg10[%c0_59, %c0_60] : memref<128x128xf32, #tpu.memory_space<vmem>>, vector<128x128xf32>
    %c0_61 = arith.constant 0 : index
    %c0_62 = arith.constant 0 : index
    %167 = vector.load %arg11[%c0_61, %c0_62] : memref<128x128xf32, #tpu.memory_space<vmem>>, vector<128x128xf32>
    %c0_63 = arith.constant 0 : index
    %c0_64 = arith.constant 0 : index
    %168 = vector.load %arg12[%c0_63, %c0_64] : memref<128x128xf32, #tpu.memory_space<vmem>>, vector<128x128xf32>
    %cst_65 = arith.constant dense<0.000000e+00> : vector<8x128xf32>
    %169 = tpu.matmul %28, %166, %cst_65 {dimension_numbers = #tpu.dot_dimension_numbers<[1], [0], [0], [1], [0, 0, 1, 1], [], []>} : vector<8x128xf32>, vector<128x128xf32>, vector<8x128xf32> -> vector<8x128xf32>
    %170 = vector.broadcast %8 : vector<1x128xf32> to vector<8x128xf32>
    %171 = arith.addf %169, %170 : vector<8x128xf32>
    %cst_66 = arith.constant 0.000000e+00 : f32
    %172 = vector.broadcast %cst_66 : f32 to vector<8x128xf32>
    %173 = arith.maximumf %171, %172 : vector<8x128xf32>
    %cst_67 = arith.constant dense<0.000000e+00> : vector<8x128xf32>
    %174 = tpu.matmul %173, %167, %cst_67 {dimension_numbers = #tpu.dot_dimension_numbers<[1], [0], [0], [1], [0, 0, 1, 1], [], []>} : vector<8x128xf32>, vector<128x128xf32>, vector<8x128xf32> -> vector<8x128xf32>
    %175 = vector.broadcast %9 : vector<1x128xf32> to vector<8x128xf32>
    %176 = arith.addf %174, %175 : vector<8x128xf32>
    %cst_68 = arith.constant 0.000000e+00 : f32
    %177 = vector.broadcast %cst_68 : f32 to vector<8x128xf32>
    %178 = arith.maximumf %176, %177 : vector<8x128xf32>
    %cst_69 = arith.constant dense<0.000000e+00> : vector<8x128xf32>
    %179 = tpu.matmul %178, %168, %cst_69 {dimension_numbers = #tpu.dot_dimension_numbers<[1], [0], [0], [1], [0, 0, 1, 1], [], []>} : vector<8x128xf32>, vector<128x128xf32>, vector<8x128xf32> -> vector<8x128xf32>
    %180 = vector.broadcast %10 : vector<1x128xf32> to vector<8x128xf32>
    %181 = arith.addf %179, %180 : vector<8x128xf32>
    %182 = arith.addf %165, %181 : vector<8x128xf32>
    %c0_70 = arith.constant 0 : index
    %c0_71 = arith.constant 0 : index
    %183 = vector.load %arg13[%c0_70, %c0_71] : memref<8x128xf32, #tpu.memory_space<vmem>>, vector<8x128xf32>
    tpu.vector_store %arg13[%c0_70, %c0_71], %182 {strides = array<i32>} : memref<8x128xf32, #tpu.memory_space<vmem>>, vector<8x128xf32>,
    %c8_i32 = arith.constant 8 : i32
    %184 = arith.muli %arg0, %c8_i32 : i32
    %185 = tpu.iota {dimensions = array<i32: 0>} : vector<8x1xi32>
    %186 = vector.broadcast %184 : i32 to vector<8x1xi32>
    %187 = arith.addi %186, %185 : vector<8x1xi32>
    %c2_i32_72 = arith.constant 2 : i32
    %188 = vector.broadcast %c2_i32_72 : i32 to vector<8x1xi32>
    %189 = arith.cmpi slt, %187, %188 : vector<8x1xi32>
    %190 = arith.subf %0, %181 : vector<8x128xf32>
    %191 = arith.subf %0, %165 : vector<8x128xf32>
    %192 = arith.mulf %190, %190 : vector<8x128xf32>
    %193 = arith.mulf %191, %191 : vector<8x128xf32>
    %194 = arith.addf %192, %193 : vector<8x128xf32>
    %cst_73 = arith.constant dense<0.000000e+00> : vector<8xf32>
    %195 = vector.multi_reduction <add>, %194, %cst_73 [1] : vector<8x128xf32> to vector<8xf32>
    %196 = vector.shape_cast %195 : vector<8xf32> to vector<8x1xf32>
    %197 = arith.subf %28, %56 : vector<8x128xf32>
    %198 = arith.mulf %197, %197 : vector<8x128xf32>
    %cst_74 = arith.constant dense<0.000000e+00> : vector<8xf32>
    %199 = vector.multi_reduction <add>, %198, %cst_74 [1] : vector<8x128xf32> to vector<8xf32>
    %200 = vector.shape_cast %199 : vector<8xf32> to vector<8x1xf32>
    %cst_75 = arith.constant 7.812500e-03 : f32
    %201 = vector.broadcast %cst_75 : f32 to vector<8x1xf32>
    %202 = arith.mulf %196, %201 : vector<8x1xf32>
    %cst_76 = arith.constant 7.500000e-02 : f32
    %203 = vector.broadcast %cst_76 : f32 to vector<8x1xf32>
    %204 = arith.mulf %200, %203 : vector<8x1xf32>
    %205 = arith.addf %202, %204 : vector<8x1xf32>
    %cst_77 = arith.constant 1.250000e-02 : f32
    %206 = vector.broadcast %cst_77 : f32 to vector<8x1xf32>
    %207 = arith.mulf %149, %206 : vector<8x1xf32>
    %208 = arith.addf %205, %207 : vector<8x1xf32>
    %cst_78 = arith.constant 0.000000e+00 : f32
    %209 = vector.broadcast %cst_78 : f32 to vector<8x1xf32>
    %210 = arith.select %189, %208, %209 : vector<8x1xi1>, vector<8x1xf32>
    %211 = vector.shape_cast %210 : vector<8x1xf32> to vector<1x8x1xf32>
    %cst_79 = arith.constant dense<0.000000e+00> : vector<1xf32>
    %212 = vector.multi_reduction <add>, %211, %cst_79 [1, 2] : vector<1x8x1xf32> to vector<1xf32>
    %213 = vector.shape_cast %212 : vector<1xf32> to vector<1x1x1xf32>
    %214 = vector.extract %213[0, 0, 0] : f32 from vector<1x1x1xf32>
    %215 = vector.broadcast %214 : f32 to vector<1x1xf32>
    %216 = vector.shape_cast %215 : vector<1x1xf32> to vector<1x1xf32>
    %217 = vector.broadcast %216 : vector<1x1xf32> to vector<8x128xf32>
    %c0_80 = arith.constant 0 : index
    %c0_81 = arith.constant 0 : index
    %218 = vector.load %arg14[%c0_80, %c0_81] : memref<8x128xf32, #tpu.memory_space<vmem>>, vector<8x128xf32>
    tpu.vector_store %arg14[%c0_80, %c0_81], %217 {strides = array<i32>} : memref<8x128xf32, #tpu.memory_space<vmem>>, vector<8x128xf32>,
    return
  }
  func.func @transform_0(%arg0: i32) -> (i32, i32) {
    %c0_i32 = arith.constant 0 : i32
    %c0_i32_0 = arith.constant 0 : i32
    return %arg0, %c0_i32 : i32, i32
  }
  func.func @transform_1(%arg0: i32) -> (i32, i32) {
    %c0_i32 = arith.constant 0 : i32
    %c0_i32_0 = arith.constant 0 : i32
    %c0_i32_1 = arith.constant 0 : i32
    return %c0_i32, %c0_i32_0 : i32, i32
  }
  func.func @transform_2(%arg0: i32) -> (i32, i32) {
    %c0_i32 = arith.constant 0 : i32
    %c0_i32_0 = arith.constant 0 : i32
    %c0_i32_1 = arith.constant 0 : i32
    return %c0_i32, %c0_i32_0 : i32, i32
  }
  func.func @transform_3(%arg0: i32) -> (i32, i32) {
    %c0_i32 = arith.constant 0 : i32
    %c0_i32_0 = arith.constant 0 : i32
    %c0_i32_1 = arith.constant 0 : i32
    return %c0_i32, %c0_i32_0 : i32, i32
  }
  func.func @transform_4(%arg0: i32) -> (i32, i32) {
    %c0_i32 = arith.constant 0 : i32
    %c0_i32_0 = arith.constant 0 : i32
    %c0_i32_1 = arith.constant 0 : i32
    return %c0_i32, %c0_i32_0 : i32, i32
  }
  func.func @transform_5(%arg0: i32) -> (i32, i32) {
    %c0_i32 = arith.constant 0 : i32
    %c0_i32_0 = arith.constant 0 : i32
    %c0_i32_1 = arith.constant 0 : i32
    return %c0_i32, %c0_i32_0 : i32, i32
  }
  func.func @transform_6(%arg0: i32) -> (i32, i32) {
    %c0_i32 = arith.constant 0 : i32
    %c0_i32_0 = arith.constant 0 : i32
    %c0_i32_1 = arith.constant 0 : i32
    return %c0_i32, %c0_i32_0 : i32, i32
  }
  func.func @transform_7(%arg0: i32) -> (i32, i32) {
    %c0_i32 = arith.constant 0 : i32
    %c0_i32_0 = arith.constant 0 : i32
    %c0_i32_1 = arith.constant 0 : i32
    return %c0_i32, %c0_i32_0 : i32, i32
  }
  func.func @transform_8(%arg0: i32) -> (i32, i32) {
    %c0_i32 = arith.constant 0 : i32
    %c0_i32_0 = arith.constant 0 : i32
    %c0_i32_1 = arith.constant 0 : i32
    return %c0_i32, %c0_i32_0 : i32, i32
  }
  func.func @transform_9(%arg0: i32) -> (i32, i32) {
    %c0_i32 = arith.constant 0 : i32
    %c0_i32_0 = arith.constant 0 : i32
    %c0_i32_1 = arith.constant 0 : i32
    return %c0_i32, %c0_i32_0 : i32, i32
  }
  func.func @transform_10(%arg0: i32) -> (i32, i32) {
    %c0_i32 = arith.constant 0 : i32
    %c0_i32_0 = arith.constant 0 : i32
    %c0_i32_1 = arith.constant 0 : i32
    return %c0_i32, %c0_i32_0 : i32, i32
  }
  func.func @transform_11(%arg0: i32) -> (i32, i32) {
    %c0_i32 = arith.constant 0 : i32
    %c0_i32_0 = arith.constant 0 : i32
    %c0_i32_1 = arith.constant 0 : i32
    return %c0_i32, %c0_i32_0 : i32, i32
  }
  func.func @transform_12(%arg0: i32) -> (i32, i32) {
    %c0_i32 = arith.constant 0 : i32
    %c0_i32_0 = arith.constant 0 : i32
    return %arg0, %c0_i32 : i32, i32
  }
  func.func @transform_13(%arg0: i32) -> (i32, i32) {
    %c0_i32 = arith.constant 0 : i32
    %c0_i32_0 = arith.constant 0 : i32
    return %arg0, %c0_i32 : i32, i32
  }
}

</mosaic_0001>

<llo_original>
// kernel: tpu_custom_call.1
$region0: #{tpu_custom_call.1}
  #allocation0 [shape = 'u32[]', space=smem, size = 0x4, offset = 0x4, fixed_abs, tag = 'smem constant byte address 0x4 - core index']
  #allocation1 [shape = 'u32[144,128]{1,0:T(1,128)}', space=vmem, size = 0x12000, scoped, tag = 'internal scratch']
  %s0 = inlined_call_operand.hbm [shape: f32[8,128], index: 0, kind: input, shape index: {}]
  %s1 = inlined_call_operand.hbm [shape: f32[16,128], index: 1, kind: input, shape index: {}]
  %s2 = inlined_call_operand.hbm [shape: f32[16,128], index: 2, kind: input, shape index: {}]
  %s3 = inlined_call_operand.hbm [shape: f32[128,128], index: 3, kind: input, shape index: {}]
  %s4 = inlined_call_operand.hbm [shape: f32[128,128], index: 4, kind: input, shape index: {}]
  %s5 = inlined_call_operand.hbm [shape: f32[128,128], index: 5, kind: input, shape index: {}]
  %s6 = inlined_call_operand.hbm [shape: f32[128,128], index: 6, kind: input, shape index: {}]
  %s7 = inlined_call_operand.hbm [shape: f32[128,128], index: 7, kind: input, shape index: {}]
  %s8 = inlined_call_operand.hbm [shape: f32[128,128], index: 8, kind: input, shape index: {}]
  %s9 = inlined_call_operand.hbm [shape: f32[128,128], index: 9, kind: input, shape index: {}]
  %s10 = inlined_call_operand.hbm [shape: f32[128,128], index: 10, kind: input, shape index: {}]
  %s11 = inlined_call_operand.hbm [shape: f32[128,128], index: 11, kind: input, shape index: {}]
  %s12 = inlined_call_operand.hbm [shape: f32[8,128], index: 12, kind: output, shape index: {0}]
  %s13 = inlined_call_operand.hbm [shape: f32[8,128], index: 13, kind: output, shape index: {1}]
  %14 = xla_tuple %s12, %s13
  %s15 = sld [smem:[#allocation0]]
  $region114: #{tpu_custom_call.1} parent=0
    _
  %s17 = ssub.s32 1, %s15
  %s18 = scalar_select 0, %s17, %s15
  $region1: #{tpu_custom_call.1} parent=0
    #allocation2 [shape = 'u8[4096]{0}', space=vmem, size = 0x1000, scoped, tag = 'input window, operand 0, single buffered']
    #allocation3 [shape = 's32[1]{0}', space=sflag, size = 0x4, scoped, tag = 'scoped memory for tpu_custom_call.1']
    #allocation4 [shape = 's32[1]{0}', space=sflag, size = 0x4, scoped, tag = 'scoped memory for tpu_custom_call.1']
    #allocation5 [shape = 'u8[8192]{0}', space=vmem, size = 0x2000, scoped, tag = 'input window, operand 1, single buffered']
    #allocation6 [shape = 's32[1]{0}', space=sflag, size = 0x4, scoped, tag = 'scoped memory for tpu_custom_call.1']
    #allocation7 [shape = 'u8[8192]{0}', space=vmem, size = 0x2000, scoped, tag = 'input window, operand 2, single buffered']
    #allocation8 [shape = 'u8[65536]{0}', space=vmem, size = 0x10000, scoped, tag = 'input window, operand 3, single buffered']
    #allocation9 [shape = 's32[1]{0}', space=sflag, size = 0x4, scoped, tag = 'scoped memory for tpu_custom_call.1']
    #allocation10 [shape = 'u8[65536]{0}', space=vmem, size = 0x10000, scoped, tag = 'input window, operand 4, single buffered']
    #allocation11 [shape = 'u8[65536]{0}', space=vmem, size = 0x10000, scoped, tag = 'input window, operand 5, single buffered']
    #allocation12 [shape = 's32[1]{0}', space=sflag, size = 0x4, scoped, tag = 'scoped memory for tpu_custom_call.1']
    #allocation13 [shape = 'u8[65536]{0}', space=vmem, size = 0x10000, scoped, tag = 'input window, operand 6, single buffered']
    #allocation14 [shape = 'u8[65536]{0}', space=vmem, size = 0x10000, scoped, tag = 'input window, operand 7, single buffered']
    #allocation15 [shape = 's32[1]{0}', space=sflag, size = 0x4, scoped, tag = 'scoped memory for tpu_custom_call.1']
    #allocation16 [shape = 'u8[65536]{0}', space=vmem, size = 0x10000, scoped, tag = 'input window, operand 8, single buffered']
    #allocation17 [shape = 'u8[65536]{0}', space=vmem, size = 0x10000, scoped, tag = 'input window, operand 9, single buffered']
    #allocation18 [shape = 's32[1]{0}', space=sflag, size = 0x4, scoped, tag = 'scoped memory for tpu_custom_call.1']
    #allocation19 [shape = 'u8[65536]{0}', space=vmem, size = 0x10000, scoped, tag = 'input window, operand 10, single buffered']
    #allocation20 [shape = 'u8[65536]{0}', space=vmem, size = 0x10000, scoped, tag = 'input window, operand 11, single buffered']
    #allocation21 [shape = 's32[1]{0}', space=sflag, size = 0x4, scoped, tag = 'scoped memory for tpu_custom_call.1']
    #allocation22 [shape = 'u8[4096]{0}', space=vmem, size = 0x1000, scoped, tag = 'output window, operand 0, single buffered']
    #allocation23 [shape = 'u8[4096]{0}', space=vmem, size = 0x1000, scoped, tag = 'output window, operand 1, single buffered']
    #allocation24 [shape = 's32[1]{0}', space=sflag, size = 0x4, scoped, tag = 'scoped memory for tpu_custom_call.1']
    %19 = vsyncpa [#allocation3], 0
    %20 = vsyncpa [#allocation6], 0
    %21 = vsyncpa [#allocation9], 0
    %22 = vsyncpa [#allocation12], 0
    %23 = vsyncpa [#allocation15], 0
    %24 = vsyncpa [#allocation18], 0
    %25 = vsyncpa [#allocation21], 0
    %26 = vsyncpa [#allocation4], 0
    %27 = vsyncpa [#allocation24], 0
    // Predicated region
    $region2: #{tpu_custom_call.1} parent=1 // pred_check
      _
    $region3: #{tpu_custom_call.1} parent=1 // pred_check_branch
      %29 = sbr.rel (0) target = $region5
    $region4: #{tpu_custom_call.1} parent=1 // pred_region
      %s31 = ssub.s32 128, 128
      %32 = vsyncadd [#allocation3], %s31
      %s34 = sshll.u32 [#allocation2], 4
      %s35 = int_to_ptr.vmem [resolvable:$true] %s34
      %37 = dma.hbm_to_vmem [thread:$0]  %s0, 128, %s35, [#allocation3]
    $region5: #{tpu_custom_call.1} parent=1 // pred_fallthru
      _
    // Predicated region
    $region6: #{tpu_custom_call.1} parent=1 // pred_check
      _
    $region7: #{tpu_custom_call.1} parent=1 // pred_check_branch
      %39 = sbr.rel (0) target = $region9
    $region8: #{tpu_custom_call.1} parent=1 // pred_region
      %s41 = ssub.s32 256, 256
      %42 = vsyncadd [#allocation6], %s41
      %s43 = sshll.u32 [#allocation5], 4
      %s44 = int_to_ptr.vmem [resolvable:$true] %s43
      %49 = dma.hbm_to_vmem [thread:$0]  %s1, 256, %s44, [#allocation6], 128, 128, 8
    $region9: #{tpu_custom_call.1} parent=1 // pred_fallthru
      _
    // Predicated region
    $region10: #{tpu_custom_call.1} parent=1 // pred_check
      _
    $region11: #{tpu_custom_call.1} parent=1 // pred_check_branch
      %51 = sbr.rel (0) target = $region13
    $region12: #{tpu_custom_call.1} parent=1 // pred_region
      %s53 = ssub.s32 256, 256
      %54 = vsyncadd [#allocation6], %s53
      %s55 = sshll.u32 [#allocation7], 4
      %s56 = int_to_ptr.vmem [resolvable:$true] %s55
      %61 = dma.hbm_to_vmem [thread:$0]  %s2, 256, %s56, [#allocation6], 128, 128, 8
    $region13: #{tpu_custom_call.1} parent=1 // pred_fallthru
      _
    // Predicated region
    $region14: #{tpu_custom_call.1} parent=1 // pred_check
      _
    $region15: #{tpu_custom_call.1} parent=1 // pred_check_branch
      %63 = sbr.rel (0) target = $region17
    $region16: #{tpu_custom_call.1} parent=1 // pred_region
      %s65 = ssub.s32 2048, 2048
      %66 = vsyncadd [#allocation9], %s65
      %s67 = sshll.u32 [#allocation8], 4
      %s68 = int_to_ptr.vmem [resolvable:$true] %s67
      %73 = dma.hbm_to_vmem [thread:$0]  %s3, 2048, %s68, [#allocation9], 128, 128, 8
    $region17: #{tpu_custom_call.1} parent=1 // pred_fallthru
      _
    // Predicated region
    $region18: #{tpu_custom_call.1} parent=1 // pred_check
      _
    $region19: #{tpu_custom_call.1} parent=1 // pred_check_branch
      %75 = sbr.rel (0) target = $region21
    $region20: #{tpu_custom_call.1} parent=1 // pred_region
      %s77 = ssub.s32 2048, 2048
      %78 = vsyncadd [#allocation9], %s77
      %s79 = sshll.u32 [#allocation10], 4
      %s80 = int_to_ptr.vmem [resolvable:$true] %s79
      %85 = dma.hbm_to_vmem [thread:$0]  %s4, 2048, %s80, [#allocation9], 128, 128, 8
    $region21: #{tpu_custom_call.1} parent=1 // pred_fallthru
      _
    // Predicated region
    $region22: #{tpu_custom_call.1} parent=1 // pred_check
      _
    $region23: #{tpu_custom_call.1} parent=1 // pred_check_branch
      %87 = sbr.rel (0) target = $region25
    $region24: #{tpu_custom_call.1} parent=1 // pred_region
      %s89 = ssub.s32 2048, 2048
      %90 = vsyncadd [#allocation12], %s89
      %s91 = sshll.u32 [#allocation11], 4
      %s92 = int_to_ptr.vmem [resolvable:$true] %s91
      %97 = dma.hbm_to_vmem [thread:$0]  %s5, 2048, %s92, [#allocation12], 128, 128, 8
    $region25: #{tpu_custom_call.1} parent=1 // pred_fallthru
      _
    // Predicated region
    $region26: #{tpu_custom_call.1} parent=1 // pred_check
      _
    $region27: #{tpu_custom_call.1} parent=1 // pred_check_branch
      %99 = sbr.rel (0) target = $region29
    $region28: #{tpu_custom_call.1} parent=1 // pred_region
      %s101 = ssub.s32 2048, 2048
      %102 = vsyncadd [#allocation12], %s101
      %s103 = sshll.u32 [#allocation13], 4
      %s104 = int_to_ptr.vmem [resolvable:$true] %s103
      %109 = dma.hbm_to_vmem [thread:$0]  %s6, 2048, %s104, [#allocation12], 128, 128, 8
    $region29: #{tpu_custom_call.1} parent=1 // pred_fallthru
      _
    // Predicated region
    $region30: #{tpu_custom_call.1} parent=1 // pred_check
      _
    $region31: #{tpu_custom_call.1} parent=1 // pred_check_branch
      %111 = sbr.rel (0) target = $region33
    $region32: #{tpu_custom_call.1} parent=1 // pred_region
      %s113 = ssub.s32 2048, 2048
      %114 = vsyncadd [#allocation15], %s113
      %s115 = sshll.u32 [#allocation14], 4
      %s116 = int_to_ptr.vmem [resolvable:$true] %s115
      %121 = dma.hbm_to_vmem [thread:$0]  %s7, 2048, %s116, [#allocation15], 128, 128, 8
    $region33: #{tpu_custom_call.1} parent=1 // pred_fallthru
      _
    // Predicated region
    $region34: #{tpu_custom_call.1} parent=1 // pred_check
      _
    $region35: #{tpu_custom_call.1} parent=1 // pred_check_branch
      %123 = sbr.rel (0) target = $region37
    $region36: #{tpu_custom_call.1} parent=1 // pred_region
      %s125 = ssub.s32 2048, 2048
      %126 = vsyncadd [#allocation15], %s125
      %s127 = sshll.u32 [#allocation16], 4
      %s128 = int_to_ptr.vmem [resolvable:$true] %s127
      %133 = dma.hbm_to_vmem [thread:$0]  %s8, 2048, %s128, [#allocation15], 128, 128, 8
    $region37: #{tpu_custom_call.1} parent=1 // pred_fallthru
      _
    // Predicated region
    $region38: #{tpu_custom_call.1} parent=1 // pred_check
      _
    $region39: #{tpu_custom_call.1} parent=1 // pred_check_branch
      %135 = sbr.rel (0) target = $region41
    $region40: #{tpu_custom_call.1} parent=1 // pred_region
      %s137 = ssub.s32 2048, 2048
      %138 = vsyncadd [#allocation18], %s137
      %s139 = sshll.u32 [#allocation17], 4
      %s140 = int_to_ptr.vmem [resolvable:$true] %s139
      %145 = dma.hbm_to_vmem [thread:$0]  %s9, 2048, %s140, [#allocation18], 128, 128, 8
    $region41: #{tpu_custom_call.1} parent=1 // pred_fallthru
      _
    // Predicated region
    $region42: #{tpu_custom_call.1} parent=1 // pred_check
      _
    $region43: #{tpu_custom_call.1} parent=1 // pred_check_branch
      %147 = sbr.rel (0) target = $region45
    $region44: #{tpu_custom_call.1} parent=1 // pred_region
      %s149 = ssub.s32 2048, 2048
      %150 = vsyncadd [#allocation18], %s149
      %s151 = sshll.u32 [#allocation19], 4
      %s152 = int_to_ptr.vmem [resolvable:$true] %s151
      %157 = dma.hbm_to_vmem [thread:$0]  %s10, 2048, %s152, [#allocation18], 128, 128, 8
    $region45: #{tpu_custom_call.1} parent=1 // pred_fallthru
      _
    // Predicated region
    $region46: #{tpu_custom_call.1} parent=1 // pred_check
      _
    $region47: #{tpu_custom_call.1} parent=1 // pred_check_branch
      %159 = sbr.rel (0) target = $region49
    $region48: #{tpu_custom_call.1} parent=1 // pred_region
      %s161 = ssub.s32 2048, 2048
      %162 = vsyncadd [#allocation21], %s161
      %s163 = sshll.u32 [#allocation20], 4
      %s164 = int_to_ptr.vmem [resolvable:$true] %s163
      %169 = dma.hbm_to_vmem [thread:$0]  %s11, 2048, %s164, [#allocation21], 128, 128, 8
    $region49: #{tpu_custom_call.1} parent=1 // pred_fallthru
      _
    // Predicated region
    $region50: #{tpu_custom_call.1} parent=1 // pred_check
      _
    $region51: #{tpu_custom_call.1} parent=1 // pred_check_branch
      %171 = sbr.rel (0) target = $region53
    $region52: #{tpu_custom_call.1} parent=1 // pred_region
      %172 = dma.done [#allocation3], 128
    $region53: #{tpu_custom_call.1} parent=1 // pred_fallthru
      _
    // Predicated region
    $region54: #{tpu_custom_call.1} parent=1 // pred_check
      _
    $region55: #{tpu_custom_call.1} parent=1 // pred_check_branch
      %174 = sbr.rel (0) target = $region57
    $region56: #{tpu_custom_call.1} parent=1 // pred_region
      %175 = dma.done [#allocation6], 256
    $region57: #{tpu_custom_call.1} parent=1 // pred_fallthru
      _
    // Predicated region
    $region58: #{tpu_custom_call.1} parent=1 // pred_check
      _
    $region59: #{tpu_custom_call.1} parent=1 // pred_check_branch
      %177 = sbr.rel (0) target = $region61
    $region60: #{tpu_custom_call.1} parent=1 // pred_region
      %178 = dma.done [#allocation6], 256
    $region61: #{tpu_custom_call.1} parent=1 // pred_fallthru
      _
    // Predicated region
    $region62: #{tpu_custom_call.1} parent=1 // pred_check
      _
    $region63: #{tpu_custom_call.1} parent=1 // pred_check_branch
      %180 = sbr.rel (0) target = $region65
    $region64: #{tpu_custom_call.1} parent=1 // pred_region
      %181 = dma.done [#allocation9], 2048
    $region65: #{tpu_custom_call.1} parent=1 // pred_fallthru
      _
    // Predicated region
    $region66: #{tpu_custom_call.1} parent=1 // pred_check
      _
    $region67: #{tpu_custom_call.1} parent=1 // pred_check_branch
      %183 = sbr.rel (0) target = $region69
    $region68: #{tpu_custom_call.1} parent=1 // pred_region
      %184 = dma.done [#allocation9], 2048
    $region69: #{tpu_custom_call.1} parent=1 // pred_fallthru
      _
    // Predicated region
    $region70: #{tpu_custom_call.1} parent=1 // pred_check
      _
    $region71: #{tpu_custom_call.1} parent=1 // pred_check_branch
      %186 = sbr.rel (0) target = $region73
    $region72: #{tpu_custom_call.1} parent=1 // pred_region
      %187 = dma.done [#allocation12], 2048
    $region73: #{tpu_custom_call.1} parent=1 // pred_fallthru
      _
    // Predicated region
    $region74: #{tpu_custom_call.1} parent=1 // pred_check
      _
    $region75: #{tpu_custom_call.1} parent=1 // pred_check_branch
      %189 = sbr.rel (0) target = $region77
    $region76: #{tpu_custom_call.1} parent=1 // pred_region
      %190 = dma.done [#allocation12], 2048
    $region77: #{tpu_custom_call.1} parent=1 // pred_fallthru
      _
    // Predicated region
    $region78: #{tpu_custom_call.1} parent=1 // pred_check
      _
    $region79: #{tpu_custom_call.1} parent=1 // pred_check_branch
      %192 = sbr.rel (0) target = $region81
    $region80: #{tpu_custom_call.1} parent=1 // pred_region
      %193 = dma.done [#allocation15], 2048
    $region81: #{tpu_custom_call.1} parent=1 // pred_fallthru
      _
    // Predicated region
    $region82: #{tpu_custom_call.1} parent=1 // pred_check
      _
    $region83: #{tpu_custom_call.1} parent=1 // pred_check_branch
      %195 = sbr.rel (0) target = $region85
    $region84: #{tpu_custom_call.1} parent=1 // pred_region
      %196 = dma.done [#allocation15], 2048
    $region85: #{tpu_custom_call.1} parent=1 // pred_fallthru
      _
    // Predicated region
    $region86: #{tpu_custom_call.1} parent=1 // pred_check
      _
    $region87: #{tpu_custom_call.1} parent=1 // pred_check_branch
      %198 = sbr.rel (0) target = $region89
    $region88: #{tpu_custom_call.1} parent=1 // pred_region
      %199 = dma.done [#allocation18], 2048
    $region89: #{tpu_custom_call.1} parent=1 // pred_fallthru
      _
    // Predicated region
    $region90: #{tpu_custom_call.1} parent=1 // pred_check
      _
    $region91: #{tpu_custom_call.1} parent=1 // pred_check_branch
      %201 = sbr.rel (0) target = $region93
    $region92: #{tpu_custom_call.1} parent=1 // pred_region
      %202 = dma.done [#allocation18], 2048
    $region93: #{tpu_custom_call.1} parent=1 // pred_fallthru
      _
    // Predicated region
    $region94: #{tpu_custom_call.1} parent=1 // pred_check
      _
    $region95: #{tpu_custom_call.1} parent=1 // pred_check_branch
      %204 = sbr.rel (0) target = $region97
    $region96: #{tpu_custom_call.1} parent=1 // pred_region
      %205 = dma.done [#allocation21], 2048
    $region97: #{tpu_custom_call.1} parent=1 // pred_fallthru
      _
    %v206 = vld [vmem:[#allocation2] sm:$0xff]
    %v207 = vld [vmem:[#allocation5] sm:$0xff]
    %v208 = vld [vmem:[#allocation5 + $0x8] sm:$0xff]
    %v209 = vld [vmem:[#allocation7] sm:$0x1]
    %v210 = vld [vmem:[#allocation7 + $0x1] sm:$0x1]
    %v211 = vld [vmem:[#allocation7 + $0x2] sm:$0x1]
    %v212 = vld [vmem:[#allocation7 + $0x3] sm:$0x1]
    %v213 = vld [vmem:[#allocation7 + $0x4] sm:$0x1]
    %v214 = vld [vmem:[#allocation7 + $0x5] sm:$0x1]
    %v215 = vld [vmem:[#allocation7 + $0x6] sm:$0x1]
    %v216 = vld [vmem:[#allocation7 + $0x7] sm:$0x1]
    %v217 = vld [vmem:[#allocation7 + $0x8] sm:$0x1]
    %v218 = vld [vmem:[#allocation7 + $0x9] sm:$0x1]
    %v219 = vld [vmem:[#allocation8] sm:$0xff]
    %v220 = vld [vmem:[#allocation8 + $0x8] sm:$0xff]
    %v221 = vld [vmem:[#allocation8 + $0x10] sm:$0xff]
    %v222 = vld [vmem:[#allocation8 + $0x18] sm:$0xff]
    %v223 = vld [vmem:[#allocation8 + $0x20] sm:$0xff]
    %v224 = vld [vmem:[#allocation8 + $0x28] sm:$0xff]
    %v225 = vld [vmem:[#allocation8 + $0x30] sm:$0xff]
    %v226 = vld [vmem:[#allocation8 + $0x38] sm:$0xff]
    %v227 = vld [vmem:[#allocation8 + $0x40] sm:$0xff]
    %v228 = vld [vmem:[#allocation8 + $0x48] sm:$0xff]
    %v229 = vld [vmem:[#allocation8 + $0x50] sm:$0xff]
    %v230 = vld [vmem:[#allocation8 + $0x58] sm:$0xff]
    %v231 = vld [vmem:[#allocation8 + $0x60] sm:$0xff]
    %v232 = vld [vmem:[#allocation8 + $0x68] sm:$0xff]
    %v233 = vld [vmem:[#allocation8 + $0x70] sm:$0xff]
    %v234 = vld [vmem:[#allocation8 + $0x78] sm:$0xff]
    %v235 = vld [vmem:[#allocation10] sm:$0xff]
    %v236 = vld [vmem:[#allocation10 + $0x8] sm:$0xff]
    %v237 = vld [vmem:[#allocation10 + $0x10] sm:$0xff]
    %v238 = vld [vmem:[#allocation10 + $0x18] sm:$0xff]
    %v239 = vld [vmem:[#allocation10 + $0x20] sm:$0xff]
    %v240 = vld [vmem:[#allocation10 + $0x28] sm:$0xff]
    %v241 = vld [vmem:[#allocation10 + $0x30] sm:$0xff]
    %v242 = vld [vmem:[#allocation10 + $0x38] sm:$0xff]
    %v243 = vld [vmem:[#allocation10 + $0x40] sm:$0xff]
    %v244 = vld [vmem:[#allocation10 + $0x48] sm:$0xff]
    %v245 = vld [vmem:[#allocation10 + $0x50] sm:$0xff]
    %v246 = vld [vmem:[#allocation10 + $0x58] sm:$0xff]
    %v247 = vld [vmem:[#allocation10 + $0x60] sm:$0xff]
    %v248 = vld [vmem:[#allocation10 + $0x68] sm:$0xff]
    %v249 = vld [vmem:[#allocation10 + $0x70] sm:$0xff]
    %v250 = vld [vmem:[#allocation10 + $0x78] sm:$0xff]
    %v251 = vld [vmem:[#allocation11] sm:$0xff]
    %v252 = vld [vmem:[#allocation11 + $0x8] sm:$0xff]
    %v253 = vld [vmem:[#allocation11 + $0x10] sm:$0xff]
    %v254 = vld [vmem:[#allocation11 + $0x18] sm:$0xff]
    %v255 = vld [vmem:[#allocation11 + $0x20] sm:$0xff]
    %v256 = vld [vmem:[#allocation11 + $0x28] sm:$0xff]
    %v257 = vld [vmem:[#allocation11 + $0x30] sm:$0xff]
    %v258 = vld [vmem:[#allocation11 + $0x38] sm:$0xff]
    %v259 = vld [vmem:[#allocation11 + $0x40] sm:$0xff]
    %v260 = vld [vmem:[#allocation11 + $0x48] sm:$0xff]
    %v261 = vld [vmem:[#allocation11 + $0x50] sm:$0xff]
    %v262 = vld [vmem:[#allocation11 + $0x58] sm:$0xff]
    %v263 = vld [vmem:[#allocation11 + $0x60] sm:$0xff]
    %v264 = vld [vmem:[#allocation11 + $0x68] sm:$0xff]
    %v265 = vld [vmem:[#allocation11 + $0x70] sm:$0xff]
    %v266 = vld [vmem:[#allocation11 + $0x78] sm:$0xff]
    %v267 = vlaneseq
    %v268 = vshrl.u32 %v267, 7
    %v269 = vsub.s32 0, %v268
    %v270 = vrot.slane %v209, %v269
    %271 = vmatprep.subr.mxu0 0.0
    %272 = vmatpush1.msra.mxu0 %v219
    %273 = vmatprep.subr.mxu0 0.0
    %274 = vmatpush1.msra.mxu0 %v220
    %275 = vmatprep.subr.mxu0 0.0
    %276 = vmatpush1.msra.mxu0 %v221
    %277 = vmatprep.subr.mxu0 0.0
    %278 = vmatpush1.msra.mxu0 %v222
    %279 = vmatprep.subr.mxu0 0.0
    %280 = vmatpush1.msra.mxu0 %v223
    %281 = vmatprep.subr.mxu0 0.0
    %282 = vmatpush1.msra.mxu0 %v224
    %283 = vmatprep.subr.mxu0 0.0
    %284 = vmatpush1.msra.mxu0 %v225
    %285 = vmatprep.subr.mxu0 0.0
    %286 = vmatpush1.msra.mxu0 %v226
    %287 = vmatprep.subr.mxu0 0.0
    %288 = vmatpush1.msra.mxu0 %v227
    %289 = vmatprep.subr.mxu0 0.0
    %290 = vmatpush1.msra.mxu0 %v228
    %291 = vmatprep.subr.mxu0 0.0
    %292 = vmatpush1.msra.mxu0 %v229
    %293 = vmatprep.subr.mxu0 0.0
    %294 = vmatpush1.msra.mxu0 %v230
    %295 = vmatprep.subr.mxu0 0.0
    %296 = vmatpush1.msra.mxu0 %v231
    %297 = vmatprep.subr.mxu0 0.0
    %298 = vmatpush1.msra.mxu0 %v232
    %299 = vmatprep.subr.mxu0 0.0
    %300 = vmatpush1.msra.mxu0 %v233
    %301 = vmatprep.subr.mxu0 0.0
    %302 = vmatpush1.msra.mxu0 %v234
    %303 = vmatprep.subr.mxu0 0.0
    %304 = vmatpush1.msra.mxu0 0.0
    %305 = vmatprep.subr.mxu0 0.0
    %306 = vmatpush1.msra.mxu0 0.0
    %307 = vmatprep.subr.mxu0 0.0
    %308 = vmatpush1.msra.mxu0 0.0
    %309 = vmatprep.subr.mxu0 0.0
    %310 = vmatpush1.msra.mxu0 0.0
    %311 = vmatprep.subr.mxu0 0.0
    %312 = vmatpush1.msra.mxu0 0.0
    %313 = vmatprep.subr.mxu0 0.0
    %314 = vmatpush1.msra.mxu0 0.0
    %315 = vmatprep.subr.mxu0 0.0
    %316 = vmatpush1.msra.mxu0 0.0
    %317 = vmatprep.subr.mxu0 0.0
    %318 = vmatpush1.msra.mxu0 0.0
    %319 = vmatprep.subr.mxu0 0.0
    %320 = vmatpush1.msra.mxu0 0.0
    %321 = vmatprep.subr.mxu0 0.0
    %322 = vmatpush1.msra.mxu0 0.0
    %323 = vmatprep.subr.mxu0 0.0
    %324 = vmatpush1.msra.mxu0 0.0
    %325 = vmatprep.subr.mxu0 0.0
    %326 = vmatpush1.msra.mxu0 0.0
    %327 = vmatprep.subr.mxu0 0.0
    %328 = vmatpush1.msra.mxu0 0.0
    %329 = vmatprep.subr.mxu0 0.0
    %330 = vmatpush1.msra.mxu0 0.0
    %331 = vmatprep.subr.mxu0 0.0
    %332 = vmatpush1.msra.mxu0 0.0
    %333 = vmatprep.subr.mxu0 0.0
    %334 = vmatpush1.msra.mxu0 0.0
    %335 = vmatprep.mubr.f32.mxu0 0.0
    %336 = vmatmul.mubr.f32.gmra.mrb[0].mxu0 %v206
    %v337 = vpop.f32.mrb[0].mxu0
    %v338 = vadd.f32 %v270, %v337
    %v339 = vpop.f32.mrb[0].mxu0
    %340 = vdwg.mxu0
    %v341 = vmax.f32 %v338, 0.0
    %v342 = vlaneseq
    %v343 = vshrl.u32 %v342, 7
    %v344 = vsub.s32 0, %v343
    %v345 = vrot.slane %v210, %v344
    %346 = vmatprep.subr.mxu0 0.0
    %347 = vmatpush1.msra.mxu0 %v235
    %348 = vmatprep.subr.mxu0 0.0
    %349 = vmatpush1.msra.mxu0 %v236
    %350 = vmatprep.subr.mxu0 0.0
    %351 = vmatpush1.msra.mxu0 %v237
    %352 = vmatprep.subr.mxu0 0.0
    %353 = vmatpush1.msra.mxu0 %v238
    %354 = vmatprep.subr.mxu0 0.0
    %355 = vmatpush1.msra.mxu0 %v239
    %356 = vmatprep.subr.mxu0 0.0
    %357 = vmatpush1.msra.mxu0 %v240
    %358 = vmatprep.subr.mxu0 0.0
    %359 = vmatpush1.msra.mxu0 %v241
    %360 = vmatprep.subr.mxu0 0.0
    %361 = vmatpush1.msra.mxu0 %v242
    %362 = vmatprep.subr.mxu0 0.0
    %363 = vmatpush1.msra.mxu0 %v243
    %364 = vmatprep.subr.mxu0 0.0
    %365 = vmatpush1.msra.mxu0 %v244
    %366 = vmatprep.subr.mxu0 0.0
    %367 = vmatpush1.msra.mxu0 %v245
    %368 = vmatprep.subr.mxu0 0.0
    %369 = vmatpush1.msra.mxu0 %v246
    %370 = vmatprep.subr.mxu0 0.0
    %371 = vmatpush1.msra.mxu0 %v247
    %372 = vmatprep.subr.mxu0 0.0
    %373 = vmatpush1.msra.mxu0 %v248
    %374 = vmatprep.subr.mxu0 0.0
    %375 = vmatpush1.msra.mxu0 %v249
    %376 = vmatprep.subr.mxu0 0.0
    %377 = vmatpush1.msra.mxu0 %v250
    %378 = vmatprep.subr.mxu0 0.0
    %379 = vmatpush1.msra.mxu0 0.0
    %380 = vmatprep.subr.mxu0 0.0
    %381 = vmatpush1.msra.mxu0 0.0
    %382 = vmatprep.subr.mxu0 0.0
    %383 = vmatpush1.msra.mxu0 0.0
    %384 = vmatprep.subr.mxu0 0.0
    %385 = vmatpush1.msra.mxu0 0.0
    %386 = vmatprep.subr.mxu0 0.0
    %387 = vmatpush1.msra.mxu0 0.0
    %388 = vmatprep.subr.mxu0 0.0
    %389 = vmatpush1.msra.mxu0 0.0
    %390 = vmatprep.subr.mxu0 0.0
    %391 = vmatpush1.msra.mxu0 0.0
    %392 = vmatprep.subr.mxu0 0.0
    %393 = vmatpush1.msra.mxu0 0.0
    %394 = vmatprep.subr.mxu0 0.0
    %395 = vmatpush1.msra.mxu0 0.0
    %396 = vmatprep.subr.mxu0 0.0
    %397 = vmatpush1.msra.mxu0 0.0
    %398 = vmatprep.subr.mxu0 0.0
    %399 = vmatpush1.msra.mxu0 0.0
    %400 = vmatprep.subr.mxu0 0.0
    %401 = vmatpush1.msra.mxu0 0.0
    %402 = vmatprep.subr.mxu0 0.0
    %403 = vmatpush1.msra.mxu0 0.0
    %404 = vmatprep.subr.mxu0 0.0
    %405 = vmatpush1.msra.mxu0 0.0
    %406 = vmatprep.subr.mxu0 0.0
    %407 = vmatpush1.msra.mxu0 0.0
    %408 = vmatprep.subr.mxu0 0.0
    %409 = vmatpush1.msra.mxu0 0.0
    %410 = vmatprep.mubr.f32.mxu0 0.0
    %411 = vmatmul.mubr.f32.gmra.mrb[0].mxu0 %v341
    %v412 = vpop.f32.mrb[0].mxu0
    %v413 = vadd.f32 %v345, %v412
    %v414 = vpop.f32.mrb[0].mxu0
    %415 = vdwg.mxu0
    %v416 = vmax.f32 %v413, 0.0
    %v417 = vlaneseq
    %v418 = vshrl.u32 %v417, 7
    %v419 = vsub.s32 0, %v418
    %v420 = vrot.slane %v211, %v419
    %421 = vmatprep.subr.mxu0 0.0
    %422 = vmatpush1.msra.mxu0 %v251
    %423 = vmatprep.subr.mxu0 0.0
    %424 = vmatpush1.msra.mxu0 %v252
    %425 = vmatprep.subr.mxu0 0.0
    %426 = vmatpush1.msra.mxu0 %v253
    %427 = vmatprep.subr.mxu0 0.0
    %428 = vmatpush1.msra.mxu0 %v254
    %429 = vmatprep.subr.mxu0 0.0
    %430 = vmatpush1.msra.mxu0 %v255
    %431 = vmatprep.subr.mxu0 0.0
    %432 = vmatpush1.msra.mxu0 %v256
    %433 = vmatprep.subr.mxu0 0.0
    %434 = vmatpush1.msra.mxu0 %v257
    %435 = vmatprep.subr.mxu0 0.0
    %436 = vmatpush1.msra.mxu0 %v258
    %437 = vmatprep.subr.mxu0 0.0
    %438 = vmatpush1.msra.mxu0 %v259
    %439 = vmatprep.subr.mxu0 0.0
    %440 = vmatpush1.msra.mxu0 %v260
    %441 = vmatprep.subr.mxu0 0.0
    %442 = vmatpush1.msra.mxu0 %v261
    %443 = vmatprep.subr.mxu0 0.0
    %444 = vmatpush1.msra.mxu0 %v262
    %445 = vmatprep.subr.mxu0 0.0
    %446 = vmatpush1.msra.mxu0 %v263
    %447 = vmatprep.subr.mxu0 0.0
    %448 = vmatpush1.msra.mxu0 %v264
    %449 = vmatprep.subr.mxu0 0.0
    %450 = vmatpush1.msra.mxu0 %v265
    %451 = vmatprep.subr.mxu0 0.0
    %452 = vmatpush1.msra.mxu0 %v266
    %453 = vmatprep.subr.mxu0 0.0
    %454 = vmatpush1.msra.mxu0 0.0
    %455 = vmatprep.subr.mxu0 0.0
    %456 = vmatpush1.msra.mxu0 0.0
    %457 = vmatprep.subr.mxu0 0.0
    %458 = vmatpush1.msra.mxu0 0.0
    %459 = vmatprep.subr.mxu0 0.0
    %460 = vmatpush1.msra.mxu0 0.0
    %461 = vmatprep.subr.mxu0 0.0
    %462 = vmatpush1.msra.mxu0 0.0
    %463 = vmatprep.subr.mxu0 0.0
    %464 = vmatpush1.msra.mxu0 0.0
    %465 = vmatprep.subr.mxu0 0.0
    %466 = vmatpush1.msra.mxu0 0.0
    %467 = vmatprep.subr.mxu0 0.0
    %468 = vmatpush1.msra.mxu0 0.0
    %469 = vmatprep.subr.mxu0 0.0
    %470 = vmatpush1.msra.mxu0 0.0
    %471 = vmatprep.subr.mxu0 0.0
    %472 = vmatpush1.msra.mxu0 0.0
    %473 = vmatprep.subr.mxu0 0.0
    %474 = vmatpush1.msra.mxu0 0.0
    %475 = vmatprep.subr.mxu0 0.0
    %476 = vmatpush1.msra.mxu0 0.0
    %477 = vmatprep.subr.mxu0 0.0
    %478 = vmatpush1.msra.mxu0 0.0
    %479 = vmatprep.subr.mxu0 0.0
    %480 = vmatpush1.msra.mxu0 0.0
    %481 = vmatprep.subr.mxu0 0.0
    %482 = vmatpush1.msra.mxu0 0.0
    %483 = vmatprep.subr.mxu0 0.0
    %484 = vmatpush1.msra.mxu0 0.0
    %485 = vmatprep.mubr.f32.mxu0 0.0
    %486 = vmatmul.mubr.f32.gmra.mrb[0].mxu0 %v416
    %v487 = vpop.f32.mrb[0].mxu0
    %v488 = vadd.f32 %v420, %v487
    %v489 = vpop.f32.mrb[0].mxu0
    %490 = vdwg.mxu0
    %v491 = vtanh.pop %v488
    %v492 = vmul.f32 %v491, %v491
    %493 = vadd.xlane.f32.xlu0 %v492
    %v494 = vpop.xlane.xlu0 %493
    %495 = vmatprep.subr.mxu0 0.0
    %496 = vmatpush1.xpose.msra.mxu0 %v207
    %497 = vmatprep.subr.mxu0 0.0
    %498 = vmatpush1.xpose.msra.mxu0 %v208
    %499 = vmatprep.subr.mxu0 0.0
    %500 = vmatpush1.xpose.msra.mxu0 0.0
    %501 = vmatprep.subr.mxu0 0.0
    %502 = vmatpush1.xpose.msra.mxu0 0.0
    %503 = vmatprep.subr.mxu0 0.0
    %504 = vmatpush1.xpose.msra.mxu0 0.0
    %505 = vmatprep.subr.mxu0 0.0
    %506 = vmatpush1.xpose.msra.mxu0 0.0
    %507 = vmatprep.subr.mxu0 0.0
    %508 = vmatpush1.xpose.msra.mxu0 0.0
    %509 = vmatprep.subr.mxu0 0.0
    %510 = vmatpush1.xpose.msra.mxu0 0.0
    %511 = vmatprep.subr.mxu0 0.0
    %512 = vmatpush1.xpose.msra.mxu0 0.0
    %513 = vmatprep.subr.mxu0 0.0
    %514 = vmatpush1.xpose.msra.mxu0 0.0
    %515 = vmatprep.subr.mxu0 0.0
    %516 = vmatpush1.xpose.msra.mxu0 0.0
    %517 = vmatprep.subr.mxu0 0.0
    %518 = vmatpush1.xpose.msra.mxu0 0.0
    %519 = vmatprep.subr.mxu0 0.0
    %520 = vmatpush1.xpose.msra.mxu0 0.0
    %521 = vmatprep.subr.mxu0 0.0
    %522 = vmatpush1.xpose.msra.mxu0 0.0
    %523 = vmatprep.subr.mxu0 0.0
    %524 = vmatpush1.xpose.msra.mxu0 0.0
    %525 = vmatprep.subr.mxu0 0.0
    %526 = vmatpush1.xpose.msra.mxu0 0.0
    %527 = vmatprep.subr.mxu0 0.0
    %528 = vmatpush1.xpose.msra.mxu0 0.0
    %529 = vmatprep.subr.mxu0 0.0
    %530 = vmatpush1.xpose.msra.mxu0 0.0
    %531 = vmatprep.subr.mxu0 0.0
    %532 = vmatpush1.xpose.msra.mxu0 0.0
    %533 = vmatprep.subr.mxu0 0.0
    %534 = vmatpush1.xpose.msra.mxu0 0.0
    %535 = vmatprep.subr.mxu0 0.0
    %536 = vmatpush1.xpose.msra.mxu0 0.0
    %537 = vmatprep.subr.mxu0 0.0
    %538 = vmatpush1.xpose.msra.mxu0 0.0
    %539 = vmatprep.subr.mxu0 0.0
    %540 = vmatpush1.xpose.msra.mxu0 0.0
    %541 = vmatprep.subr.mxu0 0.0
    %542 = vmatpush1.xpose.msra.mxu0 0.0
    %543 = vmatprep.subr.mxu0 0.0
    %544 = vmatpush1.xpose.msra.mxu0 0.0
    %545 = vmatprep.subr.mxu0 0.0
    %546 = vmatpush1.xpose.msra.mxu0 0.0
    %547 = vmatprep.subr.mxu0 0.0
    %548 = vmatpush1.xpose.msra.mxu0 0.0
    %549 = vmatprep.subr.mxu0 0.0
    %550 = vmatpush1.xpose.msra.mxu0 0.0
    %551 = vmatprep.subr.mxu0 0.0
    %552 = vmatpush1.xpose.msra.mxu0 0.0
    %553 = vmatprep.subr.mxu0 0.0
    %554 = vmatpush1.xpose.msra.mxu0 0.0
    %555 = vmatprep.subr.mxu0 0.0
    %556 = vmatpush1.xpose.msra.mxu0 0.0
    %557 = vmatprep.subr.mxu0 0.0
    %558 = vmatpush1.xpose.msra.mxu0 0.0
    %559 = vmatprep.mubr.f32.mxu0 0.0
    %560 = vmatmul.mubr.f32.gmra.mrb[0].mxu0 %v491
    %v561 = vpop.f32.mrb[0].mxu0
    %v562 = vadd.f32 0.0, %v561
    %v563 = vpop.f32.mrb[0].mxu0
    %564 = vdwg.mxu0
    %v565 = vlaneseq
    %v566 = vand.u32 %v565, 127
    %v567 = vlaneseq
    %v568 = vshrl.u32 %v567, 7
    %v569 = vsub.s32 0, %v568
    %v570 = vrot.slane %v218, %v569
    %v571 = vadd.f32 %v494, %v570
    %v572 = vmul.f32 %v562, 2.0
    %v573 = vsub.f32 %v571, %v572
    %vm574 = vcmp.lt.s32.totalorder %v566, 9
    %v575 = vsel %vm574, %v573, 1e+30
    %vm576 = vcmask 130048
    %v577 = vsel %vm576, %v575, inf
    %578 = vmin.xlane.f32.xlu0 %v577
    %v579 = vpop.xlane.xlu0 %578
    %vm580 = vcmp.eq.f32.partialorder %v575, %v579
    %v581 = vsel %vm580, %v566, 16
    %v582 = vsel %vm576, %v581, 2147483647
    %v583 = vand.u32 %v582, 65535
    %v584 = vshra.s32 %v582, 16
    %v585 = vcvt.s32.f32 %v583
    %v586 = vcvt.s32.f32 %v584
    %587 = vmin.xlane.f32.xlu0 %v586
    %v588 = vpop.xlane.xlu0 %587
    %vm589 = vcmp.eq.f32.partialorder %v586, %v588
    %v590 = vsel %vm589, %v585, inf
    %591 = vmin.xlane.f32.xlu0 %v590
    %v592 = vpop.xlane.xlu0 %591
    %v593 = vcvt.f32.s32 %v592
    %v594 = vcvt.f32.s32 %v588
    %v595 = vshll.u32 %v594, 16
    %v596 = vadd.s32 %v595, %v593
    %vm597 = vcmp.eq.s32.totalorder %v566, %v596
    %v598 = vsel %vm597, 1, 0
    %v599 = vcvt.s32.f32 %v598
    %v601 = vsel %vm576, %v599, 0
    %603 = vmatprep.subr.mxu0 0.0
    %604 = vmatpush1.msra.mxu0 %v207
    %605 = vmatprep.subr.mxu0 0.0
    %606 = vmatpush1.msra.mxu0 %v208
    %607 = vmatprep.subr.mxu0 0.0
    %608 = vmatpush1.msra.mxu0 0.0
    %609 = vmatprep.subr.mxu0 0.0
    %610 = vmatpush1.msra.mxu0 0.0
    %611 = vmatprep.subr.mxu0 0.0
    %612 = vmatpush1.msra.mxu0 0.0
    %613 = vmatprep.subr.mxu0 0.0
    %614 = vmatpush1.msra.mxu0 0.0
    %615 = vmatprep.subr.mxu0 0.0
    %616 = vmatpush1.msra.mxu0 0.0
    %617 = vmatprep.subr.mxu0 0.0
    %618 = vmatpush1.msra.mxu0 0.0
    %619 = vmatprep.subr.mxu0 0.0
    %620 = vmatpush1.msra.mxu0 0.0
    %621 = vmatprep.subr.mxu0 0.0
    %622 = vmatpush1.msra.mxu0 0.0
    %623 = vmatprep.subr.mxu0 0.0
    %624 = vmatpush1.msra.mxu0 0.0
    %625 = vmatprep.subr.mxu0 0.0
    %626 = vmatpush1.msra.mxu0 0.0
    %627 = vmatprep.subr.mxu0 0.0
    %628 = vmatpush1.msra.mxu0 0.0
    %629 = vmatprep.subr.mxu0 0.0
    %630 = vmatpush1.msra.mxu0 0.0
    %631 = vmatprep.subr.mxu0 0.0
    %632 = vmatpush1.msra.mxu0 0.0
    %633 = vmatprep.subr.mxu0 0.0
    %634 = vmatpush1.msra.mxu0 0.0
    %635 = vmatprep.subr.mxu0 0.0
    %636 = vmatpush1.msra.mxu0 0.0
    %637 = vmatprep.subr.mxu0 0.0
    %638 = vmatpush1.msra.mxu0 0.0
    %639 = vmatprep.subr.mxu0 0.0
    %640 = vmatpush1.msra.mxu0 0.0
    %641 = vmatprep.subr.mxu0 0.0
    %642 = vmatpush1.msra.mxu0 0.0
    %643 = vmatprep.subr.mxu0 0.0
    %644 = vmatpush1.msra.mxu0 0.0
    %645 = vmatprep.subr.mxu0 0.0
    %646 = vmatpush1.msra.mxu0 0.0
    %647 = vmatprep.subr.mxu0 0.0
    %648 = vmatpush1.msra.mxu0 0.0
    %649 = vmatprep.subr.mxu0 0.0
    %650 = vmatpush1.msra.mxu0 0.0
    %651 = vmatprep.subr.mxu0 0.0
    %652 = vmatpush1.msra.mxu0 0.0
    %653 = vmatprep.subr.mxu0 0.0
    %654 = vmatpush1.msra.mxu0 0.0
    %655 = vmatprep.subr.mxu0 0.0
    %656 = vmatpush1.msra.mxu0 0.0
    %657 = vmatprep.subr.mxu0 0.0
    %658 = vmatpush1.msra.mxu0 0.0
    %659 = vmatprep.subr.mxu0 0.0
    %660 = vmatpush1.msra.mxu0 0.0
    %661 = vmatprep.subr.mxu0 0.0
    %662 = vmatpush1.msra.mxu0 0.0
    %663 = vmatprep.subr.mxu0 0.0
    %664 = vmatpush1.msra.mxu0 0.0
    %665 = vmatprep.subr.mxu0 0.0
    %666 = vmatpush1.msra.mxu0 0.0
    %667 = vmatprep.mubr.f32.mxu0 0.0
    %668 = vmatmul.mubr.f32.gmra.mrb[0].mxu0 %v601
    %v669 = vpop.f32.mrb[0].mxu0
    %v670 = vadd.f32 0.0, %v669
    %v671 = vpop.f32.mrb[0].mxu0
    %672 = vdwg.mxu0
    %vm673 = vcmp.ge.s32.totalorder %v596, 3
    %v674 = vsel %vm673, 1, 0
    %vm675 = vcmp.ge.s32.totalorder %v596, 6
    %v676 = vsel %vm675, 1, 0
    %v677 = vadd.s32 %v674, %v676
    %v678 = vmul.u32 %v677, 3
    %v679 = vsub.s32 %v596, %v678
    %vm680 = vcmp.lt.s32.totalorder %v677, 2
    %v681 = vsel %vm680, 1, 0
    %v682 = vcvt.s32.f32 %v681
    %vm683 = vcmp.gt.s32.totalorder %v677, 0
    %v684 = vsel %vm683, 1, 0
    %v685 = vcvt.s32.f32 %v684
    %vm686 = vcmp.lt.s32.totalorder %v679, 2
    %v687 = vsel %vm686, 1, 0
    %v688 = vcvt.s32.f32 %v687
    %vm689 = vcmp.gt.s32.totalorder %v679, 0
    %v690 = vsel %vm689, 1, 0
    %v691 = vcvt.s32.f32 %v690
    %v692 = vadd.s32 %v677, 1
    %vm693 = vcmp.lt.s32.totalorder %v692, 2
    %v694 = vsel %vm693, %v692, 2
    %v695 = vmul.u32 %v694, 3
    %v696 = vadd.s32 %v695, %v679
    %v697 = vsub.s32 %v677, 1
    %vm698 = vcmp.gt.s32.totalorder %v697, 0
    %v699 = vsel %vm698, %v697, 0
    %v700 = vmul.u32 %v699, 3
    %v701 = vadd.s32 %v700, %v679
    %v702 = vadd.s32 %v679, 1
    %vm703 = vcmp.lt.s32.totalorder %v702, 2
    %v704 = vsel %vm703, %v702, 2
    %v705 = vadd.s32 %v678, %v704
    %v706 = vsub.s32 %v679, 1
    %vm707 = vcmp.gt.s32.totalorder %v706, 0
    %v708 = vsel %vm707, %v706, 0
    %v709 = vadd.s32 %v678, %v708
    %vm710 = vcmp.eq.s32.totalorder %v566, %v696
    %v711 = vsel %vm710, 1, 0
    %v712 = vcvt.s32.f32 %v711
    %v713 = vmul.f32 %v712, %v682
    %vm714 = vcmp.eq.s32.totalorder %v566, %v701
    %v715 = vsel %vm714, 1, 0
    %v716 = vcvt.s32.f32 %v715
    %v717 = vmul.f32 %v716, %v685
    %v718 = vadd.f32 %v713, %v717
    %vm719 = vcmp.eq.s32.totalorder %v566, %v705
    %v720 = vsel %vm719, 1, 0
    %v721 = vcvt.s32.f32 %v720
    %v722 = vmul.f32 %v721, %v688
    %v723 = vadd.f32 %v718, %v722
    %vm724 = vcmp.eq.s32.totalorder %v566, %v709
    %v725 = vsel %vm724, 1, 0
    %v726 = vcvt.s32.f32 %v725
    %v727 = vmul.f32 %v726, %v691
    %v728 = vadd.f32 %v723, %v727
    %v729 = vadd.f32 %v682, %v685
    %v730 = vadd.f32 %v729, %v688
    %v731 = vadd.f32 %v730, %v691
    %v732 = vmul.f32 %v728, %v575
    %v733 = vsel %vm576, %v732, 0.0
    %734 = vadd.xlane.f32.xlu0 %v733
    %v735 = vpop.xlane.xlu0 %734
    %v736 = vsub.f32 4.0, %v731
    %v737 = vmul.f32 %v736, %v494
    %v738 = vadd.f32 %v735, %v737
    %v739 = vld [vmem:[#allocation13] sm:$0xff]
    %v740 = vld [vmem:[#allocation13 + $0x8] sm:$0xff]
    %v741 = vld [vmem:[#allocation13 + $0x10] sm:$0xff]
    %v742 = vld [vmem:[#allocation13 + $0x18] sm:$0xff]
    %v743 = vld [vmem:[#allocation13 + $0x20] sm:$0xff]
    %v744 = vld [vmem:[#allocation13 + $0x28] sm:$0xff]
    %v745 = vld [vmem:[#allocation13 + $0x30] sm:$0xff]
    %v746 = vld [vmem:[#allocation13 + $0x38] sm:$0xff]
    %v747 = vld [vmem:[#allocation13 + $0x40] sm:$0xff]
    %v748 = vld [vmem:[#allocation13 + $0x48] sm:$0xff]
    %v749 = vld [vmem:[#allocation13 + $0x50] sm:$0xff]
    %v750 = vld [vmem:[#allocation13 + $0x58] sm:$0xff]
    %v751 = vld [vmem:[#allocation13 + $0x60] sm:$0xff]
    %v752 = vld [vmem:[#allocation13 + $0x68] sm:$0xff]
    %v753 = vld [vmem:[#allocation13 + $0x70] sm:$0xff]
    %v754 = vld [vmem:[#allocation13 + $0x78] sm:$0xff]
    %v755 = vld [vmem:[#allocation14] sm:$0xff]
    %v756 = vld [vmem:[#allocation14 + $0x8] sm:$0xff]
    %v757 = vld [vmem:[#allocation14 + $0x10] sm:$0xff]
    %v758 = vld [vmem:[#allocation14 + $0x18] sm:$0xff]
    %v759 = vld [vmem:[#allocation14 + $0x20] sm:$0xff]
    %v760 = vld [vmem:[#allocation14 + $0x28] sm:$0xff]
    %v761 = vld [vmem:[#allocation14 + $0x30] sm:$0xff]
    %v762 = vld [vmem:[#allocation14 + $0x38] sm:$0xff]
    %v763 = vld [vmem:[#allocation14 + $0x40] sm:$0xff]
    %v764 = vld [vmem:[#allocation14 + $0x48] sm:$0xff]
    %v765 = vld [vmem:[#allocation14 + $0x50] sm:$0xff]
    %v766 = vld [vmem:[#allocation14 + $0x58] sm:$0xff]
    %v767 = vld [vmem:[#allocation14 + $0x60] sm:$0xff]
    %v768 = vld [vmem:[#allocation14 + $0x68] sm:$0xff]
    %v769 = vld [vmem:[#allocation14 + $0x70] sm:$0xff]
    %v770 = vld [vmem:[#allocation14 + $0x78] sm:$0xff]
    %v771 = vld [vmem:[#allocation16] sm:$0xff]
    %v772 = vld [vmem:[#allocation16 + $0x8] sm:$0xff]
    %v773 = vld [vmem:[#allocation16 + $0x10] sm:$0xff]
    %v774 = vld [vmem:[#allocation16 + $0x18] sm:$0xff]
    %v775 = vld [vmem:[#allocation16 + $0x20] sm:$0xff]
    %v776 = vld [vmem:[#allocation16 + $0x28] sm:$0xff]
    %v777 = vld [vmem:[#allocation16 + $0x30] sm:$0xff]
    %v778 = vld [vmem:[#allocation16 + $0x38] sm:$0xff]
    %v779 = vld [vmem:[#allocation16 + $0x40] sm:$0xff]
    %v780 = vld [vmem:[#allocation16 + $0x48] sm:$0xff]
    %v781 = vld [vmem:[#allocation16 + $0x50] sm:$0xff]
    %v782 = vld [vmem:[#allocation16 + $0x58] sm:$0xff]
    %v783 = vld [vmem:[#allocation16 + $0x60] sm:$0xff]
    %v784 = vld [vmem:[#allocation16 + $0x68] sm:$0xff]
    %v785 = vld [vmem:[#allocation16 + $0x70] sm:$0xff]
    %v786 = vld [vmem:[#allocation16 + $0x78] sm:$0xff]
    %v787 = vlaneseq
    %v788 = vshrl.u32 %v787, 7
    %v789 = vsub.s32 0, %v788
    %v790 = vrot.slane %v212, %v789
    %791 = vmatprep.subr.mxu0 0.0
    %792 = vmatpush1.msra.mxu0 %v739
    %793 = vmatprep.subr.mxu0 0.0
    %794 = vmatpush1.msra.mxu0 %v740
    %795 = vmatprep.subr.mxu0 0.0
    %796 = vmatpush1.msra.mxu0 %v741
    %797 = vmatprep.subr.mxu0 0.0
    %798 = vmatpush1.msra.mxu0 %v742
    %799 = vmatprep.subr.mxu0 0.0
    %800 = vmatpush1.msra.mxu0 %v743
    %801 = vmatprep.subr.mxu0 0.0
    %802 = vmatpush1.msra.mxu0 %v744
    %803 = vmatprep.subr.mxu0 0.0
    %804 = vmatpush1.msra.mxu0 %v745
    %805 = vmatprep.subr.mxu0 0.0
    %806 = vmatpush1.msra.mxu0 %v746
    %807 = vmatprep.subr.mxu0 0.0
    %808 = vmatpush1.msra.mxu0 %v747
    %809 = vmatprep.subr.mxu0 0.0
    %810 = vmatpush1.msra.mxu0 %v748
    %811 = vmatprep.subr.mxu0 0.0
    %812 = vmatpush1.msra.mxu0 %v749
    %813 = vmatprep.subr.mxu0 0.0
    %814 = vmatpush1.msra.mxu0 %v750
    %815 = vmatprep.subr.mxu0 0.0
    %816 = vmatpush1.msra.mxu0 %v751
    %817 = vmatprep.subr.mxu0 0.0
    %818 = vmatpush1.msra.mxu0 %v752
    %819 = vmatprep.subr.mxu0 0.0
    %820 = vmatpush1.msra.mxu0 %v753
    %821 = vmatprep.subr.mxu0 0.0
    %822 = vmatpush1.msra.mxu0 %v754
    %823 = vmatprep.subr.mxu0 0.0
    %824 = vmatpush1.msra.mxu0 0.0
    %825 = vmatprep.subr.mxu0 0.0
    %826 = vmatpush1.msra.mxu0 0.0
    %827 = vmatprep.subr.mxu0 0.0
    %828 = vmatpush1.msra.mxu0 0.0
    %829 = vmatprep.subr.mxu0 0.0
    %830 = vmatpush1.msra.mxu0 0.0
    %831 = vmatprep.subr.mxu0 0.0
    %832 = vmatpush1.msra.mxu0 0.0
    %833 = vmatprep.subr.mxu0 0.0
    %834 = vmatpush1.msra.mxu0 0.0
    %835 = vmatprep.subr.mxu0 0.0
    %836 = vmatpush1.msra.mxu0 0.0
    %837 = vmatprep.subr.mxu0 0.0
    %838 = vmatpush1.msra.mxu0 0.0
    %839 = vmatprep.subr.mxu0 0.0
    %840 = vmatpush1.msra.mxu0 0.0
    %841 = vmatprep.subr.mxu0 0.0
    %842 = vmatpush1.msra.mxu0 0.0
    %843 = vmatprep.subr.mxu0 0.0
    %844 = vmatpush1.msra.mxu0 0.0
    %845 = vmatprep.subr.mxu0 0.0
    %846 = vmatpush1.msra.mxu0 0.0
    %847 = vmatprep.subr.mxu0 0.0
    %848 = vmatpush1.msra.mxu0 0.0
    %849 = vmatprep.subr.mxu0 0.0
    %850 = vmatpush1.msra.mxu0 0.0
    %851 = vmatprep.subr.mxu0 0.0
    %852 = vmatpush1.msra.mxu0 0.0
    %853 = vmatprep.subr.mxu0 0.0
    %854 = vmatpush1.msra.mxu0 0.0
    %855 = vmatprep.mubr.f32.mxu0 0.0
    %856 = vmatmul.mubr.f32.gmra.mrb[0].mxu0 %v670
    %v857 = vpop.f32.mrb[0].mxu0
    %v858 = vadd.f32 %v790, %v857
    %v859 = vpop.f32.mrb[0].mxu0
    %860 = vdwg.mxu0
    %v861 = vmax.f32 %v858, 0.0
    %v862 = vlaneseq
    %v863 = vshrl.u32 %v862, 7
    %v864 = vsub.s32 0, %v863
    %v865 = vrot.slane %v213, %v864
    %866 = vmatprep.subr.mxu0 0.0
    %867 = vmatpush1.msra.mxu0 %v755
    %868 = vmatprep.subr.mxu0 0.0
    %869 = vmatpush1.msra.mxu0 %v756
    %870 = vmatprep.subr.mxu0 0.0
    %871 = vmatpush1.msra.mxu0 %v757
    %872 = vmatprep.subr.mxu0 0.0
    %873 = vmatpush1.msra.mxu0 %v758
    %874 = vmatprep.subr.mxu0 0.0
    %875 = vmatpush1.msra.mxu0 %v759
    %876 = vmatprep.subr.mxu0 0.0
    %877 = vmatpush1.msra.mxu0 %v760
    %878 = vmatprep.subr.mxu0 0.0
    %879 = vmatpush1.msra.mxu0 %v761
    %880 = vmatprep.subr.mxu0 0.0
    %881 = vmatpush1.msra.mxu0 %v762
    %882 = vmatprep.subr.mxu0 0.0
    %883 = vmatpush1.msra.mxu0 %v763
    %884 = vmatprep.subr.mxu0 0.0
    %885 = vmatpush1.msra.mxu0 %v764
    %886 = vmatprep.subr.mxu0 0.0
    %887 = vmatpush1.msra.mxu0 %v765
    %888 = vmatprep.subr.mxu0 0.0
    %889 = vmatpush1.msra.mxu0 %v766
    %890 = vmatprep.subr.mxu0 0.0
    %891 = vmatpush1.msra.mxu0 %v767
    %892 = vmatprep.subr.mxu0 0.0
    %893 = vmatpush1.msra.mxu0 %v768
    %894 = vmatprep.subr.mxu0 0.0
    %895 = vmatpush1.msra.mxu0 %v769
    %896 = vmatprep.subr.mxu0 0.0
    %897 = vmatpush1.msra.mxu0 %v770
    %898 = vmatprep.subr.mxu0 0.0
    %899 = vmatpush1.msra.mxu0 0.0
    %900 = vmatprep.subr.mxu0 0.0
    %901 = vmatpush1.msra.mxu0 0.0
    %902 = vmatprep.subr.mxu0 0.0
    %903 = vmatpush1.msra.mxu0 0.0
    %904 = vmatprep.subr.mxu0 0.0
    %905 = vmatpush1.msra.mxu0 0.0
    %906 = vmatprep.subr.mxu0 0.0
    %907 = vmatpush1.msra.mxu0 0.0
    %908 = vmatprep.subr.mxu0 0.0
    %909 = vmatpush1.msra.mxu0 0.0
    %910 = vmatprep.subr.mxu0 0.0
    %911 = vmatpush1.msra.mxu0 0.0
    %912 = vmatprep.subr.mxu0 0.0
    %913 = vmatpush1.msra.mxu0 0.0
    %914 = vmatprep.subr.mxu0 0.0
    %915 = vmatpush1.msra.mxu0 0.0
    %916 = vmatprep.subr.mxu0 0.0
    %917 = vmatpush1.msra.mxu0 0.0
    %918 = vmatprep.subr.mxu0 0.0
    %919 = vmatpush1.msra.mxu0 0.0
    %920 = vmatprep.subr.mxu0 0.0
    %921 = vmatpush1.msra.mxu0 0.0
    %922 = vmatprep.subr.mxu0 0.0
    %923 = vmatpush1.msra.mxu0 0.0
    %924 = vmatprep.subr.mxu0 0.0
    %925 = vmatpush1.msra.mxu0 0.0
    %926 = vmatprep.subr.mxu0 0.0
    %927 = vmatpush1.msra.mxu0 0.0
    %928 = vmatprep.subr.mxu0 0.0
    %929 = vmatpush1.msra.mxu0 0.0
    %930 = vmatprep.mubr.f32.mxu0 0.0
    %931 = vmatmul.mubr.f32.gmra.mrb[0].mxu0 %v861
    %v932 = vpop.f32.mrb[0].mxu0
    %v933 = vadd.f32 %v865, %v932
    %v934 = vpop.f32.mrb[0].mxu0
    %935 = vdwg.mxu0
    %v936 = vmax.f32 %v933, 0.0
    %v937 = vlaneseq
    %v938 = vshrl.u32 %v937, 7
    %v939 = vsub.s32 0, %v938
    %v940 = vrot.slane %v214, %v939
    %941 = vmatprep.subr.mxu0 0.0
    %942 = vmatpush1.msra.mxu0 %v771
    %943 = vmatprep.subr.mxu0 0.0
    %944 = vmatpush1.msra.mxu0 %v772
    %945 = vmatprep.subr.mxu0 0.0
    %946 = vmatpush1.msra.mxu0 %v773
    %947 = vmatprep.subr.mxu0 0.0
    %948 = vmatpush1.msra.mxu0 %v774
    %949 = vmatprep.subr.mxu0 0.0
    %950 = vmatpush1.msra.mxu0 %v775
    %951 = vmatprep.subr.mxu0 0.0
    %952 = vmatpush1.msra.mxu0 %v776
    %953 = vmatprep.subr.mxu0 0.0
    %954 = vmatpush1.msra.mxu0 %v777
    %955 = vmatprep.subr.mxu0 0.0
    %956 = vmatpush1.msra.mxu0 %v778
    %957 = vmatprep.subr.mxu0 0.0
    %958 = vmatpush1.msra.mxu0 %v779
    %959 = vmatprep.subr.mxu0 0.0
    %960 = vmatpush1.msra.mxu0 %v780
    %961 = vmatprep.subr.mxu0 0.0
    %962 = vmatpush1.msra.mxu0 %v781
    %963 = vmatprep.subr.mxu0 0.0
    %964 = vmatpush1.msra.mxu0 %v782
    %965 = vmatprep.subr.mxu0 0.0
    %966 = vmatpush1.msra.mxu0 %v783
    %967 = vmatprep.subr.mxu0 0.0
    %968 = vmatpush1.msra.mxu0 %v784
    %969 = vmatprep.subr.mxu0 0.0
    %970 = vmatpush1.msra.mxu0 %v785
    %971 = vmatprep.subr.mxu0 0.0
    %972 = vmatpush1.msra.mxu0 %v786
    %973 = vmatprep.subr.mxu0 0.0
    %974 = vmatpush1.msra.mxu0 0.0
    %975 = vmatprep.subr.mxu0 0.0
    %976 = vmatpush1.msra.mxu0 0.0
    %977 = vmatprep.subr.mxu0 0.0
    %978 = vmatpush1.msra.mxu0 0.0
    %979 = vmatprep.subr.mxu0 0.0
    %980 = vmatpush1.msra.mxu0 0.0
    %981 = vmatprep.subr.mxu0 0.0
    %982 = vmatpush1.msra.mxu0 0.0
    %983 = vmatprep.subr.mxu0 0.0
    %984 = vmatpush1.msra.mxu0 0.0
    %985 = vmatprep.subr.mxu0 0.0
    %986 = vmatpush1.msra.mxu0 0.0
    %987 = vmatprep.subr.mxu0 0.0
    %988 = vmatpush1.msra.mxu0 0.0
    %989 = vmatprep.subr.mxu0 0.0
    %990 = vmatpush1.msra.mxu0 0.0
    %991 = vmatprep.subr.mxu0 0.0
    %992 = vmatpush1.msra.mxu0 0.0
    %993 = vmatprep.subr.mxu0 0.0
    %994 = vmatpush1.msra.mxu0 0.0
    %995 = vmatprep.subr.mxu0 0.0
    %996 = vmatpush1.msra.mxu0 0.0
    %997 = vmatprep.subr.mxu0 0.0
    %998 = vmatpush1.msra.mxu0 0.0
    %999 = vmatprep.subr.mxu0 0.0
    %1000 = vmatpush1.msra.mxu0 0.0
    %1001 = vmatprep.subr.mxu0 0.0
    %1002 = vmatpush1.msra.mxu0 0.0
    %1003 = vmatprep.subr.mxu0 0.0
    %1004 = vmatpush1.msra.mxu0 0.0
    %1005 = vmatprep.mubr.f32.mxu0 0.0
    %1006 = vmatmul.mubr.f32.gmra.mrb[0].mxu0 %v936
    %v1007 = vpop.f32.mrb[0].mxu0
    %v1008 = vadd.f32 %v940, %v1007
    %v1009 = vpop.f32.mrb[0].mxu0
    %1010 = vdwg.mxu0
    %v1011 = vld [vmem:[#allocation17] sm:$0xff]
    %v1012 = vld [vmem:[#allocation17 + $0x8] sm:$0xff]
    %v1013 = vld [vmem:[#allocation17 + $0x10] sm:$0xff]
    %v1014 = vld [vmem:[#allocation17 + $0x18] sm:$0xff]
    %v1015 = vld [vmem:[#allocation17 + $0x20] sm:$0xff]
    %v1016 = vld [vmem:[#allocation17 + $0x28] sm:$0xff]
    %v1017 = vld [vmem:[#allocation17 + $0x30] sm:$0xff]
    %v1018 = vld [vmem:[#allocation17 + $0x38] sm:$0xff]
    %v1019 = vld [vmem:[#allocation17 + $0x40] sm:$0xff]
    %v1020 = vld [vmem:[#allocation17 + $0x48] sm:$0xff]
    %v1021 = vld [vmem:[#allocation17 + $0x50] sm:$0xff]
    %v1022 = vld [vmem:[#allocation17 + $0x58] sm:$0xff]
    %v1023 = vld [vmem:[#allocation17 + $0x60] sm:$0xff]
    %v1024 = vld [vmem:[#allocation17 + $0x68] sm:$0xff]
    %v1025 = vld [vmem:[#allocation17 + $0x70] sm:$0xff]
    %v1026 = vld [vmem:[#allocation17 + $0x78] sm:$0xff]
    %v1027 = vld [vmem:[#allocation19] sm:$0xff]
    %v1028 = vld [vmem:[#allocation19 + $0x8] sm:$0xff]
    %v1029 = vld [vmem:[#allocation19 + $0x10] sm:$0xff]
    %v1030 = vld [vmem:[#allocation19 + $0x18] sm:$0xff]
    %v1031 = vld [vmem:[#allocation19 + $0x20] sm:$0xff]
    %v1032 = vld [vmem:[#allocation19 + $0x28] sm:$0xff]
    %v1033 = vld [vmem:[#allocation19 + $0x30] sm:$0xff]
    %v1034 = vld [vmem:[#allocation19 + $0x38] sm:$0xff]
    %v1035 = vld [vmem:[#allocation19 + $0x40] sm:$0xff]
    %v1036 = vld [vmem:[#allocation19 + $0x48] sm:$0xff]
    %v1037 = vld [vmem:[#allocation19 + $0x50] sm:$0xff]
    %v1038 = vld [vmem:[#allocation19 + $0x58] sm:$0xff]
    %v1039 = vld [vmem:[#allocation19 + $0x60] sm:$0xff]
    %v1040 = vld [vmem:[#allocation19 + $0x68] sm:$0xff]
    %v1041 = vld [vmem:[#allocation19 + $0x70] sm:$0xff]
    %v1042 = vld [vmem:[#allocation19 + $0x78] sm:$0xff]
    %v1043 = vld [vmem:[#allocation20] sm:$0xff]
    %v1044 = vld [vmem:[#allocation20 + $0x8] sm:$0xff]
    %v1045 = vld [vmem:[#allocation20 + $0x10] sm:$0xff]
    %v1046 = vld [vmem:[#allocation20 + $0x18] sm:$0xff]
    %v1047 = vld [vmem:[#allocation20 + $0x20] sm:$0xff]
    %v1048 = vld [vmem:[#allocation20 + $0x28] sm:$0xff]
    %v1049 = vld [vmem:[#allocation20 + $0x30] sm:$0xff]
    %v1050 = vld [vmem:[#allocation20 + $0x38] sm:$0xff]
    %v1051 = vld [vmem:[#allocation20 + $0x40] sm:$0xff]
    %v1052 = vld [vmem:[#allocation20 + $0x48] sm:$0xff]
    %v1053 = vld [vmem:[#allocation20 + $0x50] sm:$0xff]
    %v1054 = vld [vmem:[#allocation20 + $0x58] sm:$0xff]
    %v1055 = vld [vmem:[#allocation20 + $0x60] sm:$0xff]
    %v1056 = vld [vmem:[#allocation20 + $0x68] sm:$0xff]
    %v1057 = vld [vmem:[#allocation20 + $0x70] sm:$0xff]
    %v1058 = vld [vmem:[#allocation20 + $0x78] sm:$0xff]
    %v1059 = vlaneseq
    %v1060 = vshrl.u32 %v1059, 7
    %v1061 = vsub.s32 0, %v1060
    %v1062 = vrot.slane %v215, %v1061
    %1063 = vmatprep.subr.mxu0 0.0
    %1064 = vmatpush1.msra.mxu0 %v1011
    %1065 = vmatprep.subr.mxu0 0.0
    %1066 = vmatpush1.msra.mxu0 %v1012
    %1067 = vmatprep.subr.mxu0 0.0
    %1068 = vmatpush1.msra.mxu0 %v1013
    %1069 = vmatprep.subr.mxu0 0.0
    %1070 = vmatpush1.msra.mxu0 %v1014
    %1071 = vmatprep.subr.mxu0 0.0
    %1072 = vmatpush1.msra.mxu0 %v1015
    %1073 = vmatprep.subr.mxu0 0.0
    %1074 = vmatpush1.msra.mxu0 %v1016
    %1075 = vmatprep.subr.mxu0 0.0
    %1076 = vmatpush1.msra.mxu0 %v1017
    %1077 = vmatprep.subr.mxu0 0.0
    %1078 = vmatpush1.msra.mxu0 %v1018
    %1079 = vmatprep.subr.mxu0 0.0
    %1080 = vmatpush1.msra.mxu0 %v1019
    %1081 = vmatprep.subr.mxu0 0.0
    %1082 = vmatpush1.msra.mxu0 %v1020
    %1083 = vmatprep.subr.mxu0 0.0
    %1084 = vmatpush1.msra.mxu0 %v1021
    %1085 = vmatprep.subr.mxu0 0.0
    %1086 = vmatpush1.msra.mxu0 %v1022
    %1087 = vmatprep.subr.mxu0 0.0
    %1088 = vmatpush1.msra.mxu0 %v1023
    %1089 = vmatprep.subr.mxu0 0.0
    %1090 = vmatpush1.msra.mxu0 %v1024
    %1091 = vmatprep.subr.mxu0 0.0
    %1092 = vmatpush1.msra.mxu0 %v1025
    %1093 = vmatprep.subr.mxu0 0.0
    %1094 = vmatpush1.msra.mxu0 %v1026
    %1095 = vmatprep.subr.mxu0 0.0
    %1096 = vmatpush1.msra.mxu0 0.0
    %1097 = vmatprep.subr.mxu0 0.0
    %1098 = vmatpush1.msra.mxu0 0.0
    %1099 = vmatprep.subr.mxu0 0.0
    %1100 = vmatpush1.msra.mxu0 0.0
    %1101 = vmatprep.subr.mxu0 0.0
    %1102 = vmatpush1.msra.mxu0 0.0
    %1103 = vmatprep.subr.mxu0 0.0
    %1104 = vmatpush1.msra.mxu0 0.0
    %1105 = vmatprep.subr.mxu0 0.0
    %1106 = vmatpush1.msra.mxu0 0.0
    %1107 = vmatprep.subr.mxu0 0.0
    %1108 = vmatpush1.msra.mxu0 0.0
    %1109 = vmatprep.subr.mxu0 0.0
    %1110 = vmatpush1.msra.mxu0 0.0
    %1111 = vmatprep.subr.mxu0 0.0
    %1112 = vmatpush1.msra.mxu0 0.0
    %1113 = vmatprep.subr.mxu0 0.0
    %1114 = vmatpush1.msra.mxu0 0.0
    %1115 = vmatprep.subr.mxu0 0.0
    %1116 = vmatpush1.msra.mxu0 0.0
    %1117 = vmatprep.subr.mxu0 0.0
    %1118 = vmatpush1.msra.mxu0 0.0
    %1119 = vmatprep.subr.mxu0 0.0
    %1120 = vmatpush1.msra.mxu0 0.0
    %1121 = vmatprep.subr.mxu0 0.0
    %1122 = vmatpush1.msra.mxu0 0.0
    %1123 = vmatprep.subr.mxu0 0.0
    %1124 = vmatpush1.msra.mxu0 0.0
    %1125 = vmatprep.subr.mxu0 0.0
    %1126 = vmatpush1.msra.mxu0 0.0
    %1127 = vmatprep.mubr.f32.mxu0 0.0
    %1128 = vmatmul.mubr.f32.gmra.mrb[0].mxu0 %v491
    %v1129 = vpop.f32.mrb[0].mxu0
    %v1130 = vadd.f32 %v1062, %v1129
    %v1131 = vpop.f32.mrb[0].mxu0
    %1132 = vdwg.mxu0
    %v1133 = vmax.f32 %v1130, 0.0
    %v1134 = vlaneseq
    %v1135 = vshrl.u32 %v1134, 7
    %v1136 = vsub.s32 0, %v1135
    %v1137 = vrot.slane %v216, %v1136
    %1138 = vmatprep.subr.mxu0 0.0
    %1139 = vmatpush1.msra.mxu0 %v1027
    %1140 = vmatprep.subr.mxu0 0.0
    %1141 = vmatpush1.msra.mxu0 %v1028
    %1142 = vmatprep.subr.mxu0 0.0
    %1143 = vmatpush1.msra.mxu0 %v1029
    %1144 = vmatprep.subr.mxu0 0.0
    %1145 = vmatpush1.msra.mxu0 %v1030
    %1146 = vmatprep.subr.mxu0 0.0
    %1147 = vmatpush1.msra.mxu0 %v1031
    %1148 = vmatprep.subr.mxu0 0.0
    %1149 = vmatpush1.msra.mxu0 %v1032
    %1150 = vmatprep.subr.mxu0 0.0
    %1151 = vmatpush1.msra.mxu0 %v1033
    %1152 = vmatprep.subr.mxu0 0.0
    %1153 = vmatpush1.msra.mxu0 %v1034
    %1154 = vmatprep.subr.mxu0 0.0
    %1155 = vmatpush1.msra.mxu0 %v1035
    %1156 = vmatprep.subr.mxu0 0.0
    %1157 = vmatpush1.msra.mxu0 %v1036
    %1158 = vmatprep.subr.mxu0 0.0
    %1159 = vmatpush1.msra.mxu0 %v1037
    %1160 = vmatprep.subr.mxu0 0.0
    %1161 = vmatpush1.msra.mxu0 %v1038
    %1162 = vmatprep.subr.mxu0 0.0
    %1163 = vmatpush1.msra.mxu0 %v1039
    %1164 = vmatprep.subr.mxu0 0.0
    %1165 = vmatpush1.msra.mxu0 %v1040
    %1166 = vmatprep.subr.mxu0 0.0
    %1167 = vmatpush1.msra.mxu0 %v1041
    %1168 = vmatprep.subr.mxu0 0.0
    %1169 = vmatpush1.msra.mxu0 %v1042
    %1170 = vmatprep.subr.mxu0 0.0
    %1171 = vmatpush1.msra.mxu0 0.0
    %1172 = vmatprep.subr.mxu0 0.0
    %1173 = vmatpush1.msra.mxu0 0.0
    %1174 = vmatprep.subr.mxu0 0.0
    %1175 = vmatpush1.msra.mxu0 0.0
    %1176 = vmatprep.subr.mxu0 0.0
    %1177 = vmatpush1.msra.mxu0 0.0
    %1178 = vmatprep.subr.mxu0 0.0
    %1179 = vmatpush1.msra.mxu0 0.0
    %1180 = vmatprep.subr.mxu0 0.0
    %1181 = vmatpush1.msra.mxu0 0.0
    %1182 = vmatprep.subr.mxu0 0.0
    %1183 = vmatpush1.msra.mxu0 0.0
    %1184 = vmatprep.subr.mxu0 0.0
    %1185 = vmatpush1.msra.mxu0 0.0
    %1186 = vmatprep.subr.mxu0 0.0
    %1187 = vmatpush1.msra.mxu0 0.0
    %1188 = vmatprep.subr.mxu0 0.0
    %1189 = vmatpush1.msra.mxu0 0.0
    %1190 = vmatprep.subr.mxu0 0.0
    %1191 = vmatpush1.msra.mxu0 0.0
    %1192 = vmatprep.subr.mxu0 0.0
    %1193 = vmatpush1.msra.mxu0 0.0
    %1194 = vmatprep.subr.mxu0 0.0
    %1195 = vmatpush1.msra.mxu0 0.0
    %1196 = vmatprep.subr.mxu0 0.0
    %1197 = vmatpush1.msra.mxu0 0.0
    %1198 = vmatprep.subr.mxu0 0.0
    %1199 = vmatpush1.msra.mxu0 0.0
    %1200 = vmatprep.subr.mxu0 0.0
    %1201 = vmatpush1.msra.mxu0 0.0
    %1202 = vmatprep.mubr.f32.mxu0 0.0
    %1203 = vmatmul.mubr.f32.gmra.mrb[0].mxu0 %v1133
    %v1204 = vpop.f32.mrb[0].mxu0
    %v1205 = vadd.f32 %v1137, %v1204
    %v1206 = vpop.f32.mrb[0].mxu0
    %1207 = vdwg.mxu0
    %v1208 = vmax.f32 %v1205, 0.0
    %v1209 = vlaneseq
    %v1210 = vshrl.u32 %v1209, 7
    %v1211 = vsub.s32 0, %v1210
    %v1212 = vrot.slane %v217, %v1211
    %1213 = vmatprep.subr.mxu0 0.0
    %1214 = vmatpush1.msra.mxu0 %v1043
    %1215 = vmatprep.subr.mxu0 0.0
    %1216 = vmatpush1.msra.mxu0 %v1044
    %1217 = vmatprep.subr.mxu0 0.0
    %1218 = vmatpush1.msra.mxu0 %v1045
    %1219 = vmatprep.subr.mxu0 0.0
    %1220 = vmatpush1.msra.mxu0 %v1046
    %1221 = vmatprep.subr.mxu0 0.0
    %1222 = vmatpush1.msra.mxu0 %v1047
    %1223 = vmatprep.subr.mxu0 0.0
    %1224 = vmatpush1.msra.mxu0 %v1048
    %1225 = vmatprep.subr.mxu0 0.0
    %1226 = vmatpush1.msra.mxu0 %v1049
    %1227 = vmatprep.subr.mxu0 0.0
    %1228 = vmatpush1.msra.mxu0 %v1050
    %1229 = vmatprep.subr.mxu0 0.0
    %1230 = vmatpush1.msra.mxu0 %v1051
    %1231 = vmatprep.subr.mxu0 0.0
    %1232 = vmatpush1.msra.mxu0 %v1052
    %1233 = vmatprep.subr.mxu0 0.0
    %1234 = vmatpush1.msra.mxu0 %v1053
    %1235 = vmatprep.subr.mxu0 0.0
    %1236 = vmatpush1.msra.mxu0 %v1054
    %1237 = vmatprep.subr.mxu0 0.0
    %1238 = vmatpush1.msra.mxu0 %v1055
    %1239 = vmatprep.subr.mxu0 0.0
    %1240 = vmatpush1.msra.mxu0 %v1056
    %1241 = vmatprep.subr.mxu0 0.0
    %1242 = vmatpush1.msra.mxu0 %v1057
    %1243 = vmatprep.subr.mxu0 0.0
    %1244 = vmatpush1.msra.mxu0 %v1058
    %1245 = vmatprep.subr.mxu0 0.0
    %1246 = vmatpush1.msra.mxu0 0.0
    %1247 = vmatprep.subr.mxu0 0.0
    %1248 = vmatpush1.msra.mxu0 0.0
    %1249 = vmatprep.subr.mxu0 0.0
    %1250 = vmatpush1.msra.mxu0 0.0
    %1251 = vmatprep.subr.mxu0 0.0
    %1252 = vmatpush1.msra.mxu0 0.0
    %1253 = vmatprep.subr.mxu0 0.0
    %1254 = vmatpush1.msra.mxu0 0.0
    %1255 = vmatprep.subr.mxu0 0.0
    %1256 = vmatpush1.msra.mxu0 0.0
    %1257 = vmatprep.subr.mxu0 0.0
    %1258 = vmatpush1.msra.mxu0 0.0
    %1259 = vmatprep.subr.mxu0 0.0
    %1260 = vmatpush1.msra.mxu0 0.0
    %1261 = vmatprep.subr.mxu0 0.0
    %1262 = vmatpush1.msra.mxu0 0.0
    %1263 = vmatprep.subr.mxu0 0.0
    %1264 = vmatpush1.msra.mxu0 0.0
    %1265 = vmatprep.subr.mxu0 0.0
    %1266 = vmatpush1.msra.mxu0 0.0
    %1267 = vmatprep.subr.mxu0 0.0
    %1268 = vmatpush1.msra.mxu0 0.0
    %1269 = vmatprep.subr.mxu0 0.0
    %1270 = vmatpush1.msra.mxu0 0.0
    %1271 = vmatprep.subr.mxu0 0.0
    %1272 = vmatpush1.msra.mxu0 0.0
    %1273 = vmatprep.subr.mxu0 0.0
    %1274 = vmatpush1.msra.mxu0 0.0
    %1275 = vmatprep.subr.mxu0 0.0
    %1276 = vmatpush1.msra.mxu0 0.0
    %1277 = vmatprep.mubr.f32.mxu0 0.0
    %1278 = vmatmul.mubr.f32.gmra.mrb[0].mxu0 %v1208
    %v1279 = vpop.f32.mrb[0].mxu0
    %v1280 = vadd.f32 %v1212, %v1279
    %v1281 = vpop.f32.mrb[0].mxu0
    %1282 = vdwg.mxu0
    %v1283 = vadd.f32 %v1008, %v1280
    %1284 = vst [vmem:[#allocation22] sm:$0xff] %v1283
    %s1285 = smul.u32 0, 8
    %v1286 = vlaneseq
    %v1287 = vshrl.u32 %v1286, 7
    %v1288 = vstv %s1285
    %v1289 = vadd.s32 %v1288, %v1287
    %vm1290 = vcmp.lt.s32.totalorder %v1289, 2
    %v1291 = vsub.f32 %v206, %v1280
    %v1292 = vsub.f32 %v206, %v1008
    %v1293 = vmul.f32 %v1291, %v1291
    %v1294 = vmul.f32 %v1292, %v1292
    %v1295 = vadd.f32 %v1293, %v1294
    %1296 = vadd.xlane.f32.xlu0 %v1295
    %v1297 = vpop.xlane.xlu0 %1296
    %v1298 = vsub.f32 %v491, %v670
    %v1299 = vmul.f32 %v1298, %v1298
    %1300 = vadd.xlane.f32.xlu0 %v1299
    %v1301 = vpop.xlane.xlu0 %1300
    %v1302 = vmul.f32 %v1297, 0.0078125
    %v1303 = vmul.f32 %v1301, 0.075
    %v1304 = vadd.f32 %v1302, %v1303
    %v1305 = vmul.f32 %v738, 0.0125
    %v1306 = vadd.f32 %v1304, %v1305
    %v1307 = vsel %vm1290, %v1306, 0.0
    %vm1308 = vcmask 7168
    %v1309 = vsel %vm1308, %v1307, 0.0
    %1310 = vadd.xlane.f32.xlu0 %v1309
    %v1311 = vpop.xlane.xlu0 %1310
    %v1312 = vrot.slane %v1311, 4
    %v1313 = vadd.f32 %v1311, %v1312
    %v1314 = vrot.slane %v1313, 2
    %v1315 = vadd.f32 %v1313, %v1314
    %v1316 = vrot.slane %v1315, 1
    %v1317 = vadd.f32 %v1315, %v1316
    %s1318 = vtos %v1317
    %v1319 = vstv %s1318
    %1320 = vst [vmem:[#allocation23] sm:$0xff] %v1319
    // Predicated region
    $region98: #{tpu_custom_call.1} parent=1 // pred_check
      _
    $region99: #{tpu_custom_call.1} parent=1 // pred_check_branch
      %1322 = sbr.rel (0) target = $region101
    $region100: #{tpu_custom_call.1} parent=1 // pred_region
      %s1324 = ssub.s32 128, 128
      %1325 = vsyncadd [#allocation4], %s1324
      %s1327 = sshll.u32 [#allocation22], 4
      %s1328 = int_to_ptr.vmem [resolvable:$true] %s1327
      %1330 = dma.vmem_to_hbm [thread:$0]  %s1328, 128, %s12, [#allocation4]
    $region101: #{tpu_custom_call.1} parent=1 // pred_fallthru
      _
    // Predicated region
    $region102: #{tpu_custom_call.1} parent=1 // pred_check
      _
    $region103: #{tpu_custom_call.1} parent=1 // pred_check_branch
      %1332 = sbr.rel (0) target = $region105
    $region104: #{tpu_custom_call.1} parent=1 // pred_region
      %s1334 = ssub.s32 128, 128
      %1335 = vsyncadd [#allocation24], %s1334
      %s1337 = sshll.u32 [#allocation23], 4
      %s1338 = int_to_ptr.vmem [resolvable:$true] %s1337
      %1340 = dma.vmem_to_hbm [thread:$0]  %s1338, 128, %s13, [#allocation24]
    $region105: #{tpu_custom_call.1} parent=1 // pred_fallthru
      _
    // Predicated region
    $region106: #{tpu_custom_call.1} parent=1 // pred_check
      _
    $region107: #{tpu_custom_call.1} parent=1 // pred_check_branch
      %1342 = sbr.rel (0) target = $region109
    $region108: #{tpu_custom_call.1} parent=1 // pred_region
      %1343 = dma.done [#allocation4], 128
    $region109: #{tpu_custom_call.1} parent=1 // pred_fallthru
      _
    // Predicated region
    $region110: #{tpu_custom_call.1} parent=1 // pred_check
      _
    $region111: #{tpu_custom_call.1} parent=1 // pred_check_branch
      %1345 = sbr.rel (0) target = $region113
    $region112: #{tpu_custom_call.1} parent=1 // pred_region
      %1346 = dma.done [#allocation24], 128
    $region113: #{tpu_custom_call.1} parent=1 // pred_fallthru
      _
    %1347 = vsyncpa [#allocation3], 1
    %1348 = vsyncpa [#allocation6], 1
    %1349 = vsyncpa [#allocation9], 1
    %1350 = vsyncpa [#allocation12], 1
    %1351 = vsyncpa [#allocation15], 1
    %1352 = vsyncpa [#allocation18], 1
    %1353 = vsyncpa [#allocation21], 1
    %1354 = vsyncpa [#allocation4], 1
    %1355 = vsyncpa [#allocation24], 1

</llo_original>
